<compile_context>
chip_gen: v6e
topology: v6e:2x2x1
jax: 0.10.0
libtpu: 0.0.40
codegen_flags: <defaults>
</compile_context>

<pallas_src>
import functools

import numpy as np
import jax
import jax.numpy as jnp
from jax.experimental import pallas as pl
from jax.experimental.pallas import tpu as pltpu


# Same op tables as the PyTorch module (note: '4x4' has no padding entry in the
# original either, so only the odd "same"-padded kernels are usable).
KERNEL_SIZE_OPS = {'1x1': 1, '3x3': 3, '4x4': 4, '5x5': 5, '7x7': 7}
PADDING_OPS = {'1x1': 0, '3x3': 1, '5x5': 2, '7x7': 3}
ACTIVATION_OPS = ('none', 'ReLU', 'LeakyReLU')


# ----------------------------------------------------------------------------
# Small hardware-aware sizing helpers.
# ----------------------------------------------------------------------------
def _vmem_capacity_bytes():
    try:
        info = pltpu.get_tpu_info()
        cap = getattr(info, "vmem_capacity_bytes", None)
        if cap:
            return int(cap)
    except Exception:
        pass
    return 128 << 20  # v5e/v6e physical VMEM fallback


def _block_budget_bytes():
    # ~4 MiB blocks on v5e/v6e (128 MiB VMEM), ~3.2 MiB on v7x (64 MiB VMEM):
    # amortises the ~0.35 us/step pipeline overhead while keeping the
    # double-buffered working set (~5x block) comfortably inside VMEM.
    cap = _vmem_capacity_bytes()
    return int(max(1 << 20, min(4 << 20, cap // 20)))


def _pick_bc(C, H, W, budget_bytes):
    """Channels per grid step.  Must be == C or a multiple of 128 dividing C
    (lane constraint on the last block dim)."""
    cands = [C] + [m for m in range(128, C, 128) if C % m == 0]
    cands = sorted(set(cands), reverse=True)
    for bc in cands:
        if H * W * bc * 4 <= budget_bytes:
            return bc
    return min(cands)


def _pick_th(H, W, BC):
    """Rows per register tile: keep the f32 accumulator tile <= ~16 vregs."""
    limit = 64 * 1024
    for d in range(H, 0, -1):
        if H % d == 0 and d * W * BC * 4 <= limit:
            return d
    return 1


# ----------------------------------------------------------------------------
# Pallas kernels: one (image, channel-block) per grid step, channels on lanes.
# ----------------------------------------------------------------------------
def _dwconv_pad_kernel(w_ref, x_ref, o_ref, pad_ref, *, k, p, H, W, BC, TH,
                       act, alpha):
    """Depthwise k x k conv (stride 1, zero pad p>0) + fused activation.

    w_ref  : VMEM (k, k, BC)  f32   per-tap weight vectors (channel on lanes)
    x_ref  : VMEM (1, H, W, BC)     input channel block (NHWC layout)
    o_ref  : VMEM (1, H, W, BC)     output channel block
    pad_ref: VMEM (H+2p, W+2p, BC) f32 zero-padded scratch
    """
    f32 = jnp.float32
    Wp = W + 2 * p

    # ---- halo-only zeroing (interior is fully overwritten by the copy) ----
    pad_ref[0:p, :, :] = jnp.zeros((p, Wp, BC), f32)                     # top
    pad_ref[p + H:p + H + p, :, :] = jnp.zeros((p, Wp, BC), f32)         # bottom
    pad_ref[p:p + H, 0:p, :] = jnp.zeros((H, p, BC), f32)                # left
    pad_ref[p:p + H, p + W:p + W + p, :] = jnp.zeros((H, p, BC), f32)    # right

    # ---- interior copy: channel (lane) axis fully dense, no lane offset ----
    pad_ref[p:p + H, p:p + W, :] = x_ref[0].astype(f32)

    # Hoist the k*k per-tap weight vectors (loop-invariant (1,1,BC) loads).
    w_taps = [[w_ref[dh:dh + 1, dw:dw + 1, :].astype(f32) for dw in range(k)]
              for dh in range(k)]

    n_tiles = H // TH

    @pl.loop(0, n_tiles)
    def _(t):
        h0 = pl.multiple_of(t * TH, TH)
        # Accumulator initialised with the first tap's product (saves a vadd);
        # taps shift only in H (leading dim) / W (sublane dim), never in lanes.
        acc = w_taps[0][0] * pad_ref[pl.ds(h0, TH), 0:W, :]
        for dh in range(k):
            for dw in range(k):
                if dh == 0 and dw == 0:
                    continue
                acc = acc + w_taps[dh][dw] * pad_ref[pl.ds(h0 + dh, TH),
                                                     dw:dw + W, :]
        if act == 'ReLU':
            acc = jnp.maximum(acc, 0.0)
        elif act == 'LeakyReLU':
            acc = jnp.where(acc >= 0.0, acc, alpha * acc)
        o_ref[0, pl.ds(h0, TH), :, :] = acc.astype(o_ref.dtype)


def _dwconv_1x1_kernel(w_ref, x_ref, o_ref, *, BC, act, alpha):
    """1x1 depthwise conv (p == 0): no scratch, no copy — a single fused
    per-channel scale (+ activation)."""
    w = w_ref[0:1, 0:1, :].astype(jnp.float32)            # (1, 1, BC)
    acc = w * x_ref[0].astype(jnp.float32)                # broadcast over (H, W)
    if act == 'ReLU':
        acc = jnp.maximum(acc, 0.0)
    elif act == 'LeakyReLU':
        acc = jnp.where(acc >= 0.0, acc, alpha * acc)
    o_ref[0] = acc.astype(o_ref.dtype)


# ----------------------------------------------------------------------------
# Module-equivalent factory (mirrors DepthWiseConvOp.__init__ / forward).
# ----------------------------------------------------------------------------
def make_depthwise_conv_op(C_in, C_out, kernel_size, act_op, affine=True):
    assert act_op in ACTIVATION_OPS, act_op
    padding = PADDING_OPS[kernel_size]          # KeyError for '4x4', as in PyTorch
    k = KERNEL_SIZE_OPS[kernel_size]
    assert C_in == C_out, "depthwise conv (groups=C_out) requires C_in == C_out"
    alpha = 0.2                                 # LeakyReLU(0.2)

    def forward(x, weight):
        # x: (N, C, H, W) ; weight: (C_out, 1, k, k)  (PyTorch layouts)
        N, C, H, W = x.shape
        assert C == C_out, (C, C_out)
        assert weight.shape == (C_out, 1, k, k), weight.shape
        p = padding
        Hp, Wp = H + 2 * p, W + 2 * p

        # Layout plumbing: channel-on-lane (NHWC) presentation of x / weights.
        x_nhwc = jnp.transpose(x, (0, 2, 3, 1))                       # (N,H,W,C)
        w_kkc = jnp.transpose(weight[:, 0, :, :], (1, 2, 0))          # (k,k,C)
        w_kkc = w_kkc.astype(jnp.float32)

        budget = _block_budget_bytes()
        BC = _pick_bc(C, H, W, budget)
        TH = _pick_th(H, W, BC)

        # Explicit VMEM accounting + guard (double-buffered in/out + scratch).
        blk = H * W * BC * x.dtype.itemsize
        pad_bytes = Hp * Wp * BC * 4 if p > 0 else 0
        vmem_needed = 4 * blk + pad_bytes + 2 * k * k * BC * 4
        vmem_ceiling = (_vmem_capacity_bytes() * 3) // 4
        if vmem_needed > vmem_ceiling:
            # TODO(synk): halo-overlapped spatial (H) tiling for feature maps
            # whose minimal channel block does not fit VMEM.
            raise ValueError(
                f"DepthWiseConvOp block ({H}x{W}x{BC}) needs ~{vmem_needed >> 20} MiB "
                f"VMEM (> {vmem_ceiling >> 20} MiB available); spatial tiling required.")
        vmem_limit = int(min(vmem_needed + (8 << 20), vmem_ceiling))

        if p > 0:
            kernel = functools.partial(
                _dwconv_pad_kernel, k=k, p=p, H=H, W=W, BC=BC, TH=TH,
                act=act_op, alpha=alpha)
            scratch = [pltpu.VMEM((Hp, Wp, BC), jnp.float32)]
        else:
            kernel = functools.partial(
                _dwconv_1x1_kernel, BC=BC, act=act_op, alpha=alpha)
            scratch = []

        out_nhwc = pl.pallas_call(
            kernel,
            out_shape=jax.ShapeDtypeStruct((N, H, W, C), x.dtype),
            grid=(N, C // BC),
            in_specs=[
                # Per-step weight block: (k, k, BC) — bounds SMEM/VMEM use at
                # large C and removes the global flat-index math.
                pl.BlockSpec((k, k, BC), lambda n, cb: (0, 0, cb)),
                pl.BlockSpec((1, H, W, BC), lambda n, cb: (n, 0, 0, cb)),
            ],
            out_specs=pl.BlockSpec((1, H, W, BC), lambda n, cb: (n, 0, 0, cb)),
            scratch_shapes=scratch,
            compiler_params=pltpu.CompilerParams(
                # Both axes are independent -> megacore-shardable on v7x.
                dimension_semantics=("parallel", "parallel"),
                vmem_limit_bytes=vmem_limit),
        )(w_kkc, x_nhwc)

        return jnp.transpose(out_nhwc, (0, 3, 1, 2))                  # back to NCHW

    return forward


# ----------------------------------------------------------------------------
# Pure-JAX reference (grouped conv) for correctness checking.
# ----------------------------------------------------------------------------
def _reference(x, weight, padding, act_op, alpha=0.2):
    C = x.shape[1]
    out = jax.lax.conv_general_dilated(
        x, weight, window_strides=(1, 1),
        padding=[(padding, padding), (padding, padding)],
        dimension_numbers=("NCHW", "OIHW", "NCHW"),
        feature_group_count=C)
    if act_op == 'ReLU':
        out = jnp.maximum(out, 0.0)
    elif act_op == 'LeakyReLU':
        out = jnp.where(out >= 0.0, out, alpha * out)
    return out


if __name__ == "__main__":
    N, C, H, W = 2, 4, 16, 16
    key = jax.random.PRNGKey(0)

    configs = [('3x3', 'LeakyReLU'), ('5x5', 'ReLU'), ('7x7', 'none'),
               ('1x1', 'none')]
    for kernel_size, act_op in configs:
        k = KERNEL_SIZE_OPS[kernel_size]
        pad = PADDING_OPS[kernel_size]

        key, kx, kw = jax.random.split(key, 3)
        x = jax.random.normal(kx, (N, C, H, W), dtype=jnp.float32)
        weight = jax.random.normal(kw, (C, 1, k, k), dtype=jnp.float32) * (1.0 / k)

        fwd = make_depthwise_conv_op(C, C, kernel_size, act_op)
        out = jax.block_until_ready(fwd(x, weight))
        ref = jax.block_until_ready(_reference(x, weight, pad, act_op))

        assert out.shape == (N, C, H, W), (kernel_size, out.shape)
        err = float(np.max(np.abs(np.asarray(out) - np.asarray(ref))))
        assert np.allclose(np.asarray(out), np.asarray(ref),
                           rtol=1e-4, atol=1e-4), (kernel_size, act_op, err)

    print("KERNEL_OK")
</pallas_src>

<mosaic_0001>
module attributes {stable_mosaic.version = 11 : i64} {
  func.func @_dwconv_pad_kernel(%arg0: i32, %arg1: i32, %arg2: memref<3x3x4xf32, #tpu.memory_space<vmem>>, %arg3: memref<1x16x16x4xf32, #tpu.memory_space<vmem>>, %arg4: memref<1x16x16x4xf32, #tpu.memory_space<vmem>>, %arg5: memref<18x18x4xf32, #tpu.memory_space<vmem>>) attributes {dimension_semantics = [#tpu.dimension_semantics<parallel>, #tpu.dimension_semantics<parallel>], iteration_bounds = array<i64: 2, 1>, scalar_prefetch = 0 : i64, scratch_operands = 1 : i64, tpu.core_type = #tpu.core_type<tc>, window_params = [{transform_indices = @transform_0, window_bounds = array<i64: 3, 3, 4>}, {transform_indices = @transform_1, window_bounds = array<i64: 1, 16, 16, 4>}, {transform_indices = @transform_2, window_bounds = array<i64: 1, 16, 16, 4>}]} {
    %cst = arith.constant 0.000000e+00 : f32
    %0 = vector.broadcast %cst : f32 to vector<1x18x4xf32>
    %c0 = arith.constant 0 : index
    %c0_0 = arith.constant 0 : index
    %c0_1 = arith.constant 0 : index
    %1 = vector.load %arg5[%c0, %c0_0, %c0_1] : memref<18x18x4xf32, #tpu.memory_space<vmem>>, vector<1x18x4xf32>
    tpu.vector_store %arg5[%c0, %c0_0, %c0_1], %0 {strides = array<i32>} : memref<18x18x4xf32, #tpu.memory_space<vmem>>, vector<1x18x4xf32>,
    %cst_2 = arith.constant 0.000000e+00 : f32
    %2 = vector.broadcast %cst_2 : f32 to vector<1x18x4xf32>
    %c17 = arith.constant 17 : index
    %c0_3 = arith.constant 0 : index
    %c0_4 = arith.constant 0 : index
    %3 = vector.load %arg5[%c17, %c0_3, %c0_4] : memref<18x18x4xf32, #tpu.memory_space<vmem>>, vector<1x18x4xf32>
    tpu.vector_store %arg5[%c17, %c0_3, %c0_4], %2 {strides = array<i32>} : memref<18x18x4xf32, #tpu.memory_space<vmem>>, vector<1x18x4xf32>,
    %cst_5 = arith.constant 0.000000e+00 : f32
    %4 = vector.broadcast %cst_5 : f32 to vector<16x1x4xf32>
    %c1 = arith.constant 1 : index
    %c0_6 = arith.constant 0 : index
    %c0_7 = arith.constant 0 : index
    %5 = vector.load %arg5[%c1, %c0_6, %c0_7] : memref<18x18x4xf32, #tpu.memory_space<vmem>>, vector<16x1x4xf32>
    tpu.vector_store %arg5[%c1, %c0_6, %c0_7], %4 {strides = array<i32>} : memref<18x18x4xf32, #tpu.memory_space<vmem>>, vector<16x1x4xf32>,
    %cst_8 = arith.constant 0.000000e+00 : f32
    %6 = vector.broadcast %cst_8 : f32 to vector<16x1x4xf32>
    %c1_9 = arith.constant 1 : index
    %c17_10 = arith.constant 17 : index
    %c0_11 = arith.constant 0 : index
    %7 = vector.load %arg5[%c1_9, %c17_10, %c0_11] : memref<18x18x4xf32, #tpu.memory_space<vmem>>, vector<16x1x4xf32>
    tpu.vector_store %arg5[%c1_9, %c17_10, %c0_11], %6 {strides = array<i32>} : memref<18x18x4xf32, #tpu.memory_space<vmem>>, vector<16x1x4xf32>,
    %c0_12 = arith.constant 0 : index
    %c0_13 = arith.constant 0 : index
    %c0_14 = arith.constant 0 : index
    %c0_15 = arith.constant 0 : index
    %8 = vector.load %arg3[%c0_12, %c0_13, %c0_14, %c0_15] : memref<1x16x16x4xf32, #tpu.memory_space<vmem>>, vector<1x16x16x4xf32>
    %9 = vector.shape_cast %8 : vector<1x16x16x4xf32> to vector<16x16x4xf32>
    %c1_16 = arith.constant 1 : index
    %c1_17 = arith.constant 1 : index
    %c0_18 = arith.constant 0 : index
    %10 = vector.load %arg5[%c1_16, %c1_17, %c0_18] : memref<18x18x4xf32, #tpu.memory_space<vmem>>, vector<16x16x4xf32>
    tpu.vector_store %arg5[%c1_16, %c1_17, %c0_18], %9 {strides = array<i32>} : memref<18x18x4xf32, #tpu.memory_space<vmem>>, vector<16x16x4xf32>,
    %c0_19 = arith.constant 0 : index
    %c0_20 = arith.constant 0 : index
    %c0_21 = arith.constant 0 : index
    %11 = vector.load %arg2[%c0_19, %c0_20, %c0_21] : memref<3x3x4xf32, #tpu.memory_space<vmem>>, vector<1x1x4xf32>
    %c0_22 = arith.constant 0 : index
    %c1_23 = arith.constant 1 : index
    %c0_24 = arith.constant 0 : index
    %12 = vector.load %arg2[%c0_22, %c1_23, %c0_24] : memref<3x3x4xf32, #tpu.memory_space<vmem>>, vector<1x1x4xf32>
    %c0_25 = arith.constant 0 : index
    %c2 = arith.constant 2 : index
    %c0_26 = arith.constant 0 : index
    %13 = vector.load %arg2[%c0_25, %c2, %c0_26] : memref<3x3x4xf32, #tpu.memory_space<vmem>>, vector<1x1x4xf32>
    %c1_27 = arith.constant 1 : index
    %c0_28 = arith.constant 0 : index
    %c0_29 = arith.constant 0 : index
    %14 = vector.load %arg2[%c1_27, %c0_28, %c0_29] : memref<3x3x4xf32, #tpu.memory_space<vmem>>, vector<1x1x4xf32>
    %c1_30 = arith.constant 1 : index
    %c1_31 = arith.constant 1 : index
    %c0_32 = arith.constant 0 : index
    %15 = vector.load %arg2[%c1_30, %c1_31, %c0_32] : memref<3x3x4xf32, #tpu.memory_space<vmem>>, vector<1x1x4xf32>
    %c1_33 = arith.constant 1 : index
    %c2_34 = arith.constant 2 : index
    %c0_35 = arith.constant 0 : index
    %16 = vector.load %arg2[%c1_33, %c2_34, %c0_35] : memref<3x3x4xf32, #tpu.memory_space<vmem>>, vector<1x1x4xf32>
    %c2_36 = arith.constant 2 : index
    %c0_37 = arith.constant 0 : index
    %c0_38 = arith.constant 0 : index
    %17 = vector.load %arg2[%c2_36, %c0_37, %c0_38] : memref<3x3x4xf32, #tpu.memory_space<vmem>>, vector<1x1x4xf32>
    %c2_39 = arith.constant 2 : index
    %c1_40 = arith.constant 1 : index
    %c0_41 = arith.constant 0 : index
    %18 = vector.load %arg2[%c2_39, %c1_40, %c0_41] : memref<3x3x4xf32, #tpu.memory_space<vmem>>, vector<1x1x4xf32>
    %c2_42 = arith.constant 2 : index
    %c2_43 = arith.constant 2 : index
    %c0_44 = arith.constant 0 : index
    %19 = vector.load %arg2[%c2_42, %c2_43, %c0_44] : memref<3x3x4xf32, #tpu.memory_space<vmem>>, vector<1x1x4xf32>
    %c0_i32 = arith.constant 0 : i32
    %c1_i32 = arith.constant 1 : i32
    %20 = arith.muli %c0_i32, %c1_i32 : i32
    %c0_i32_45 = arith.constant 0 : i32
    %21 = arith.addi %c0_i32_45, %20 : i32
    %c16_i32 = arith.constant 16 : i32
    %22 = arith.muli %21, %c16_i32 : i32
    %23 = tpu.assume_multiple %22, 16 : i32
    %24 = arith.index_cast %23 : i32 to index
    %c0_46 = arith.constant 0 : index
    %c0_47 = arith.constant 0 : index
    %25 = vector.load %arg5[%24, %c0_46, %c0_47] : memref<18x18x4xf32, #tpu.memory_space<vmem>>, vector<16x16x4xf32>
    %26 = vector.broadcast %11 : vector<1x1x4xf32> to vector<16x16x4xf32>
    %27 = arith.mulf %26, %25 : vector<16x16x4xf32>
    %c0_i32_48 = arith.constant 0 : i32
    %28 = arith.addi %23, %c0_i32_48 : i32
    %29 = arith.index_cast %28 : i32 to index
    %c1_49 = arith.constant 1 : index
    %c0_50 = arith.constant 0 : index
    %30 = vector.load %arg5[%29, %c1_49, %c0_50] : memref<18x18x4xf32, #tpu.memory_space<vmem>>, vector<16x16x4xf32>
    %31 = vector.broadcast %12 : vector<1x1x4xf32> to vector<16x16x4xf32>
    %32 = arith.mulf %31, %30 : vector<16x16x4xf32>
    %33 = arith.addf %27, %32 : vector<16x16x4xf32>
    %c0_i32_51 = arith.constant 0 : i32
    %34 = arith.addi %23, %c0_i32_51 : i32
    %35 = arith.index_cast %34 : i32 to index
    %c2_52 = arith.constant 2 : index
    %c0_53 = arith.constant 0 : index
    %36 = vector.load %arg5[%35, %c2_52, %c0_53] : memref<18x18x4xf32, #tpu.memory_space<vmem>>, vector<16x16x4xf32>
    %37 = vector.broadcast %13 : vector<1x1x4xf32> to vector<16x16x4xf32>
    %38 = arith.mulf %37, %36 : vector<16x16x4xf32>
    %39 = arith.addf %33, %38 : vector<16x16x4xf32>
    %c1_i32_54 = arith.constant 1 : i32
    %40 = arith.addi %23, %c1_i32_54 : i32
    %41 = arith.index_cast %40 : i32 to index
    %c0_55 = arith.constant 0 : index
    %c0_56 = arith.constant 0 : index
    %42 = vector.load %arg5[%41, %c0_55, %c0_56] : memref<18x18x4xf32, #tpu.memory_space<vmem>>, vector<16x16x4xf32>
    %43 = vector.broadcast %14 : vector<1x1x4xf32> to vector<16x16x4xf32>
    %44 = arith.mulf %43, %42 : vector<16x16x4xf32>
    %45 = arith.addf %39, %44 : vector<16x16x4xf32>
    %c1_i32_57 = arith.constant 1 : i32
    %46 = arith.addi %23, %c1_i32_57 : i32
    %47 = arith.index_cast %46 : i32 to index
    %c1_58 = arith.constant 1 : index
    %c0_59 = arith.constant 0 : index
    %48 = vector.load %arg5[%47, %c1_58, %c0_59] : memref<18x18x4xf32, #tpu.memory_space<vmem>>, vector<16x16x4xf32>
    %49 = vector.broadcast %15 : vector<1x1x4xf32> to vector<16x16x4xf32>
    %50 = arith.mulf %49, %48 : vector<16x16x4xf32>
    %51 = arith.addf %45, %50 : vector<16x16x4xf32>
    %c1_i32_60 = arith.constant 1 : i32
    %52 = arith.addi %23, %c1_i32_60 : i32
    %53 = arith.index_cast %52 : i32 to index
    %c2_61 = arith.constant 2 : index
    %c0_62 = arith.constant 0 : index
    %54 = vector.load %arg5[%53, %c2_61, %c0_62] : memref<18x18x4xf32, #tpu.memory_space<vmem>>, vector<16x16x4xf32>
    %55 = vector.broadcast %16 : vector<1x1x4xf32> to vector<16x16x4xf32>
    %56 = arith.mulf %55, %54 : vector<16x16x4xf32>
    %57 = arith.addf %51, %56 : vector<16x16x4xf32>
    %c2_i32 = arith.constant 2 : i32
    %58 = arith.addi %23, %c2_i32 : i32
    %59 = arith.index_cast %58 : i32 to index
    %c0_63 = arith.constant 0 : index
    %c0_64 = arith.constant 0 : index
    %60 = vector.load %arg5[%59, %c0_63, %c0_64] : memref<18x18x4xf32, #tpu.memory_space<vmem>>, vector<16x16x4xf32>
    %61 = vector.broadcast %17 : vector<1x1x4xf32> to vector<16x16x4xf32>
    %62 = arith.mulf %61, %60 : vector<16x16x4xf32>
    %63 = arith.addf %57, %62 : vector<16x16x4xf32>
    %c2_i32_65 = arith.constant 2 : i32
    %64 = arith.addi %23, %c2_i32_65 : i32
    %65 = arith.index_cast %64 : i32 to index
    %c1_66 = arith.constant 1 : index
    %c0_67 = arith.constant 0 : index
    %66 = vector.load %arg5[%65, %c1_66, %c0_67] : memref<18x18x4xf32, #tpu.memory_space<vmem>>, vector<16x16x4xf32>
    %67 = vector.broadcast %18 : vector<1x1x4xf32> to vector<16x16x4xf32>
    %68 = arith.mulf %67, %66 : vector<16x16x4xf32>
    %69 = arith.addf %63, %68 : vector<16x16x4xf32>
    %c2_i32_68 = arith.constant 2 : i32
    %70 = arith.addi %23, %c2_i32_68 : i32
    %71 = arith.index_cast %70 : i32 to index
    %c2_69 = arith.constant 2 : index
    %c0_70 = arith.constant 0 : index
    %72 = vector.load %arg5[%71, %c2_69, %c0_70] : memref<18x18x4xf32, #tpu.memory_space<vmem>>, vector<16x16x4xf32>
    %73 = vector.broadcast %19 : vector<1x1x4xf32> to vector<16x16x4xf32>
    %74 = arith.mulf %73, %72 : vector<16x16x4xf32>
    %75 = arith.addf %69, %74 : vector<16x16x4xf32>
    %cst_71 = arith.constant 0.000000e+00 : f32
    %76 = vector.broadcast %cst_71 : f32 to vector<16x16x4xf32>
    %77 = arith.cmpf oge, %75, %76 : vector<16x16x4xf32>
    %cst_72 = arith.constant 2.000000e-01 : f32
    %78 = vector.broadcast %cst_72 : f32 to vector<16x16x4xf32>
    %79 = arith.mulf %78, %75 : vector<16x16x4xf32>
    %80 = arith.select %77, %75, %79 : vector<16x16x4xi1>, vector<16x16x4xf32>
    %c0_73 = arith.constant 0 : index
    %81 = arith.index_cast %23 : i32 to index
    %c0_74 = arith.constant 0 : index
    %c0_75 = arith.constant 0 : index
    %82 = vector.load %arg4[%c0_73, %81, %c0_74, %c0_75] : memref<1x16x16x4xf32, #tpu.memory_space<vmem>>, vector<1x16x16x4xf32>
    %83 = vector.shape_cast %82 : vector<1x16x16x4xf32> to vector<16x16x4xf32>
    %84 = vector.shape_cast %80 : vector<16x16x4xf32> to vector<1x16x16x4xf32>
    tpu.vector_store %arg4[%c0_73, %81, %c0_74, %c0_75], %84 {strides = array<i32>} : memref<1x16x16x4xf32, #tpu.memory_space<vmem>>, vector<1x16x16x4xf32>,
    %c1_i32_76 = arith.constant 1 : i32
    return
  }
  func.func @transform_0(%arg0: i32, %arg1: i32) -> (i32, i32, i32) {
    %c0_i32 = arith.constant 0 : i32
    %c0_i32_0 = arith.constant 0 : i32
    %c0_i32_1 = arith.constant 0 : i32
    return %c0_i32, %c0_i32_0, %arg1 : i32, i32, i32
  }
  func.func @transform_1(%arg0: i32, %arg1: i32) -> (i32, i32, i32, i32) {
    %c0_i32 = arith.constant 0 : i32
    %c0_i32_0 = arith.constant 0 : i32
    %c0_i32_1 = arith.constant 0 : i32
    return %arg0, %c0_i32, %c0_i32_0, %arg1 : i32, i32, i32, i32
  }
  func.func @transform_2(%arg0: i32, %arg1: i32) -> (i32, i32, i32, i32) {
    %c0_i32 = arith.constant 0 : i32
    %c0_i32_0 = arith.constant 0 : i32
    %c0_i32_1 = arith.constant 0 : i32
    return %arg0, %c0_i32, %c0_i32_0, %arg1 : i32, i32, i32, i32
  }
}

</mosaic_0001>

<llo_original>
// kernel: tpu_custom_call.1
$region0: #{tpu_custom_call.1}
  #allocation0 [shape = 'u32[]', space=smem, size = 0x4, offset = 0x4, fixed_abs, tag = 'smem constant byte address 0x4 - core index']
  #allocation1 [shape = 'u32[144,128]{1,0:T(1,128)}', space=vmem, size = 0x12000, scoped, tag = 'internal scratch']
  #allocation2 [shape = 'f32[18,18,4]{2,1,0:T(8,128)}', space=vmem, size = 0x36000, scoped, tag = 'scratch operand']
  %s0 = inlined_call_operand.vmem [shape: f32[3,3,4], index: 0, kind: input, shape index: {}]
  %s1 = inlined_call_operand.vmem [shape: f32[2,16,16,4], index: 1, kind: input, shape index: {}]
  %s2 = inlined_call_operand.vmem [shape: f32[2,16,16,4], index: 2, kind: output, shape index: {}]
  %s3 = sld [smem:[#allocation0]]
  $region41: #{tpu_custom_call.1} parent=0
    _
  %s5 = ssub.s32 1, %s3
  %s6 = scalar_select 0, %s5, %s3
  loop: start=0, step=1, limit=4
  $region2: #{tpu_custom_call.1} parent=0 // loop_pre_header
    _
  $region3: #{tpu_custom_call.1} parent=0 // loop_header
    %s8 = sphi 0, %s12
    %p9 = scmp.ge.s32.totalorder %s8, 4
    %s15 = sphi 0, %s27
    %s16 = sphi 0, %s23
    %s17 = sphi 0, %s15
    %s18 = sphi 0, %s16
    %s19 = sphi 0, %s17
    %s20 = sphi 0, %s18
    %s30 = sphi 0, %s32
    %s33 = sphi 0, %s30
    %s34 = sphi 0, %s33
    %s50 = sphi 0, %s34
    %s58 = sphi 0, %s60
    %s61 = sphi 0, %s58
    %s62 = sphi 0, %s61
    %s78 = sphi 0, %s62
    %s86 = sphi 0, %s88
    %s89 = sphi 0, %s86
    %s90 = sphi 0, %s89
    %s106 = sphi 0, %s90
  $region4: #{tpu_custom_call.1} parent=0 // loop_header_branch
    %11 = sbr.rel (%p9) target = $region8
  $region5: #{tpu_custom_call.1} parent=0 // loop_body
    %s13 = ssub.s32 %s8, 1
    %s14 = ssub.s32 %s8, 2
    %s21 = sadd.s32 1, %s16
    %p22 = scmp.ge.s32.totalorder %s21, 1
    %s23 = scalar_select %p22, 0, %s21
    %s24 = sadd.s32 1, %s15
    %s25 = scalar_select %p22, %s24, %s15
    %p26 = scmp.ge.s32.totalorder %s25, 2
    %s27 = scalar_select %p26, 0, %s25
    %s28 = ssub.s32 %s16, %s23
    %p29 = scmp.eq.s32.totalorder %s28, 0
    %s31 = sadd.s32 %s30, 1
    %s32 = scalar_select %p29, %s30, %s31
    %p35 = pneg %p29
    %p36 = scmp.eq.s32.totalorder %s8, 1
    %p37 = por %p35, %p36
    %p38 = scmp.ne.s32.totalorder %s30, %s33
    %p39 = scmp.eq.s32.totalorder %s8, 0
    %p40 = por %p38, %p39
    %p41 = scmp.ne.s32.totalorder %s30, %s33
    %p42 = scmp.eq.s32.totalorder %s13, 1
    %p43 = por %p41, %p42
    %p44 = scmp.ne.s32.totalorder %s33, %s34
    %p45 = scmp.eq.s32.totalorder %s13, 0
    %p46 = por %p44, %p45
    %p47 = scmp.ne.s32.totalorder %s33, %s34
    %p48 = scmp.eq.s32.totalorder %s14, 1
    %p49 = por %p47, %p48
    %p51 = scmp.ne.s32.totalorder %s34, %s50
    %p52 = scmp.eq.s32.totalorder %s14, 0
    %p53 = por %p51, %p52
    %s54 = ssub.s32 %s15, %s27
    %s55 = ssub.s32 %s16, %s23
    %s56 = sor.u32 %s54, %s55
    %p57 = scmp.eq.s32.totalorder %s56, 0
    %s59 = sadd.s32 %s58, 1
    %s60 = scalar_select %p57, %s58, %s59
    %p63 = pneg %p57
    %p64 = scmp.eq.s32.totalorder %s8, 1
    %p65 = por %p63, %p64
    %p66 = scmp.ne.s32.totalorder %s58, %s61
    %p67 = scmp.eq.s32.totalorder %s8, 0
    %p68 = por %p66, %p67
    %p69 = scmp.ne.s32.totalorder %s58, %s61
    %p70 = scmp.eq.s32.totalorder %s13, 1
    %p71 = por %p69, %p70
    %p72 = scmp.ne.s32.totalorder %s61, %s62
    %p73 = scmp.eq.s32.totalorder %s13, 0
    %p74 = por %p72, %p73
    %p75 = scmp.ne.s32.totalorder %s61, %s62
    %p76 = scmp.eq.s32.totalorder %s14, 1
    %p77 = por %p75, %p76
    %p79 = scmp.ne.s32.totalorder %s62, %s78
    %p80 = scmp.eq.s32.totalorder %s14, 0
    %p81 = por %p79, %p80
    %s82 = ssub.s32 %s15, %s27
    %s83 = ssub.s32 %s16, %s23
    %s84 = sor.u32 %s82, %s83
    %p85 = scmp.eq.s32.totalorder %s84, 0
    %s87 = sadd.s32 %s86, 1
    %s88 = scalar_select %p85, %s86, %s87
    %p91 = pneg %p85
    %p92 = scmp.eq.s32.totalorder %s8, 1
    %p93 = por %p91, %p92
    %p94 = scmp.ne.s32.totalorder %s86, %s89
    %p95 = scmp.eq.s32.totalorder %s8, 0
    %p96 = por %p94, %p95
    %p97 = scmp.ne.s32.totalorder %s86, %s89
    %p98 = scmp.eq.s32.totalorder %s13, 1
    %p99 = por %p97, %p98
    %p100 = scmp.ne.s32.totalorder %s89, %s90
    %p101 = scmp.eq.s32.totalorder %s13, 0
    %p102 = por %p100, %p101
    %p103 = scmp.ne.s32.totalorder %s89, %s90
    %p104 = scmp.eq.s32.totalorder %s14, 1
    %p105 = por %p103, %p104
    %p107 = scmp.ne.s32.totalorder %s90, %s106
    %p108 = scmp.eq.s32.totalorder %s14, 0
    %p109 = por %p107, %p108
    %p110 = scmp.le.s32.totalorder 1, %s8
    %p111 = scmp.lt.s32.totalorder %s8, 3
    %p112 = pnand %p110, %p111
    %p113 = pneg %p112
    // Predicated region
    $region9: #{tpu_custom_call.1} parent=5 // pred_check
      _
    $region10: #{tpu_custom_call.1} parent=5 // pred_check_branch
      %115 = sbr.rel (%p112) target = $region12
    $region11: #{tpu_custom_call.1} parent=5 // pred_region
      %s116 = ssub.s32 %s8, 1
      // Predicated region
      $region13: #{tpu_custom_call.1} parent=11 // pred_check
        %p117 = pneg %p46
      $region14: #{tpu_custom_call.1} parent=11 // pred_check_branch
        %119 = sbr.rel (%p117) target = $region16
      $region15: #{tpu_custom_call.1} parent=11 // pred_region
        %p120 = scmp.lt.s32.totalorder %s18, 0
        %s121 = scalar_select %p120, %s18, 0
        %s122 = smul.addr %s121, 4
        %s123 = scalar_lea.vmem %s0, %s122
      $region16: #{tpu_custom_call.1} parent=11 // pred_fallthru
        _
    $region12: #{tpu_custom_call.1} parent=5 // pred_fallthru
      _
    %p124 = scmp.lt.s32.totalorder %s8, 2
    // Predicated region
    $region17: #{tpu_custom_call.1} parent=5 // pred_check
      %p125 = pneg %p124
    $region18: #{tpu_custom_call.1} parent=5 // pred_check_branch
      %127 = sbr.rel (%p125) target = $region20
    $region19: #{tpu_custom_call.1} parent=5 // pred_region
      // Predicated region
      $region21: #{tpu_custom_call.1} parent=19 // pred_check
        %p128 = pneg %p68
      $region22: #{tpu_custom_call.1} parent=19 // pred_check_branch
        %130 = sbr.rel (%p128) target = $region24
      $region23: #{tpu_custom_call.1} parent=19 // pred_region
        %p131 = scmp.lt.s32.totalorder %s15, 1
        %s132 = scalar_select %p131, %s15, 1
        %p133 = scmp.lt.s32.totalorder %s16, 0
        %s134 = scalar_select %p133, %s16, 0
        %s135 = smul.addr %s132, 32
        %s136 = sadd.s32 %s134, %s135
        %s137 = smul.addr %s136, 8
        %s138 = scalar_lea.vmem %s1, %s137
      $region24: #{tpu_custom_call.1} parent=19 // pred_fallthru
        _
    $region20: #{tpu_custom_call.1} parent=5 // pred_fallthru
      _
    %p139 = scmp.le.s32.totalorder 1, %s8
    %p140 = scmp.lt.s32.totalorder %s8, 3
    %p141 = pnand %p139, %p140
    %p142 = pneg %p141
    // Predicated region
    $region25: #{tpu_custom_call.1} parent=5 // pred_check
      _
    $region26: #{tpu_custom_call.1} parent=5 // pred_check_branch
      %144 = sbr.rel (%p141) target = $region28
    $region27: #{tpu_custom_call.1} parent=5 // pred_region
      %s145 = ssub.s32 %s8, 1
      %p146 = scmp.lt.s32.totalorder %s18, 0
      %s147 = scalar_select %p146, %s18, 0
      %s148 = smul.addr %s147, 4
      %s149 = scalar_lea.vmem %s0, %s148
      %p150 = pneg %p46
      %p151 = pneg %p43
      %p152 = scmp.lt.s32.totalorder %s17, 1
      %s153 = scalar_select %p152, %s17, 1
      %p154 = scmp.lt.s32.totalorder %s18, 0
      %s155 = scalar_select %p154, %s18, 0
      %s156 = smul.addr %s153, 32
      %s157 = sadd.s32 %s155, %s156
      %s158 = smul.addr %s157, 8
      %s159 = scalar_lea.vmem %s1, %s158
      %p160 = pneg %p74
      %p161 = pneg %p71
      %p162 = pneg %p102
      %p163 = pneg %p99
      %p164 = scmp.lt.s32.totalorder %s17, 1
      %s165 = scalar_select %p164, %s17, 1
      %p166 = scmp.lt.s32.totalorder %s18, 0
      %s167 = scalar_select %p166, %s18, 0
      %s168 = smul.addr %s165, 32
      %s169 = sadd.s32 %s167, %s168
      %s170 = smul.addr %s169, 8
      %s171 = scalar_lea.vmem %s2, %s170
      %p172 = scmp.lt.s32.totalorder %s18, 0
      %s173 = scalar_select %p172, %s18, 0
      %s174 = smul.addr %s173, 4
      %s175 = scalar_lea.vmem %s0, %s174
      %p176 = scmp.lt.s32.totalorder %s17, 1
      %s177 = scalar_select %p176, %s17, 1
      %p178 = scmp.lt.s32.totalorder %s18, 0
      %s179 = scalar_select %p178, %s18, 0
      %s180 = smul.addr %s177, 32
      %s181 = sadd.s32 %s179, %s180
      %s182 = smul.addr %s181, 8
      %s183 = scalar_lea.vmem %s1, %s182
      %p184 = scmp.lt.s32.totalorder %s17, 1
      %s185 = scalar_select %p184, %s17, 1
      %p186 = scmp.lt.s32.totalorder %s18, 0
      %s187 = scalar_select %p186, %s18, 0
      %s188 = smul.addr %s185, 32
      %s189 = sadd.s32 %s187, %s188
      %s190 = smul.addr %s189, 8
      %s191 = scalar_lea.vmem %s2, %s190
      %vm192 = vcmask 31744
      %193 = vst.msk [vmem:[#allocation2] sm:$0xff] %vm192, 0.0
      %194 = vst.msk [vmem:[#allocation2 + $0x8] sm:$0xff] %vm192, 0.0
      %vm195 = vcmask 25600
      %196 = vst.msk [vmem:[#allocation2 + $0x10] sm:$0x3] %vm195, 0.0
      %s197 = scalar_lea.vmem [#allocation2], 408
      %198 = vst.msk [vmem:[%s197] sm:$0xff] %vm192, 0.0
      %199 = vst.msk [vmem:[%s197 + $0x8] sm:$0xff] %vm192, 0.0
      %200 = vst.msk [vmem:[%s197 + $0x10] sm:$0x3] %vm195, 0.0
      %s201 = scalar_lea.vmem [#allocation2], 24
      %vm202 = vcmask 24576
      %203 = vst.msk [vmem:[%s201] sm:$0x1] %vm202, 0.0
      %204 = vst.msk [vmem:[%s201 + $0x18] sm:$0x1] %vm202, 0.0
      %205 = vst.msk [vmem:[%s201 + $0x30] sm:$0x1] %vm202, 0.0
      %206 = vst.msk [vmem:[%s201 + $0x48] sm:$0x1] %vm202, 0.0
      %207 = vst.msk [vmem:[%s201 + $0x60] sm:$0x1] %vm202, 0.0
      %208 = vst.msk [vmem:[%s201 + $0x78] sm:$0x1] %vm202, 0.0
      %209 = vst.msk [vmem:[%s201 + $0x90] sm:$0x1] %vm202, 0.0
      %210 = vst.msk [vmem:[%s201 + $0xa8] sm:$0x1] %vm202, 0.0
      %211 = vst.msk [vmem:[%s201 + $0xc0] sm:$0x1] %vm202, 0.0
      %212 = vst.msk [vmem:[%s201 + $0xd8] sm:$0x1] %vm202, 0.0
      %213 = vst.msk [vmem:[%s201 + $0xf0] sm:$0x1] %vm202, 0.0
      %214 = vst.msk [vmem:[%s201 + $0x108] sm:$0x1] %vm202, 0.0
      %215 = vst.msk [vmem:[%s201 + $0x120] sm:$0x1] %vm202, 0.0
      %216 = vst.msk [vmem:[%s201 + $0x138] sm:$0x1] %vm202, 0.0
      %217 = vst.msk [vmem:[%s201 + $0x150] sm:$0x1] %vm202, 0.0
      %218 = vst.msk [vmem:[%s201 + $0x168] sm:$0x1] %vm202, 0.0
      %219 = vst.msk [vmem:[%s201 + $0x11] sm:$0x1] %vm202, 0.0
      %220 = vst.msk [vmem:[%s201 + $0x29] sm:$0x1] %vm202, 0.0
      %221 = vst.msk [vmem:[%s201 + $0x41] sm:$0x1] %vm202, 0.0
      %222 = vst.msk [vmem:[%s201 + $0x59] sm:$0x1] %vm202, 0.0
      %223 = vst.msk [vmem:[%s201 + $0x71] sm:$0x1] %vm202, 0.0
      %224 = vst.msk [vmem:[%s201 + $0x89] sm:$0x1] %vm202, 0.0
      %225 = vst.msk [vmem:[%s201 + $0xa1] sm:$0x1] %vm202, 0.0
      %226 = vst.msk [vmem:[%s201 + $0xb9] sm:$0x1] %vm202, 0.0
      %227 = vst.msk [vmem:[%s201 + $0xd1] sm:$0x1] %vm202, 0.0
      %228 = vst.msk [vmem:[%s201 + $0xe9] sm:$0x1] %vm202, 0.0
      %229 = vst.msk [vmem:[%s201 + $0x101] sm:$0x1] %vm202, 0.0
      %230 = vst.msk [vmem:[%s201 + $0x119] sm:$0x1] %vm202, 0.0
      %231 = vst.msk [vmem:[%s201 + $0x131] sm:$0x1] %vm202, 0.0
      %232 = vst.msk [vmem:[%s201 + $0x149] sm:$0x1] %vm202, 0.0
      %233 = vst.msk [vmem:[%s201 + $0x161] sm:$0x1] %vm202, 0.0
      %234 = vst.msk [vmem:[%s201 + $0x179] sm:$0x1] %vm202, 0.0
      %v235 = vld [vmem:[%s183] sm:$0xff]
      %v236 = vld [vmem:[%s183 + $0x8] sm:$0xff]
      %v237 = vld [vmem:[%s183 + $0x10] sm:$0xff]
      %v238 = vld [vmem:[%s183 + $0x18] sm:$0xff]
      %v239 = vld [vmem:[%s183 + $0x20] sm:$0xff]
      %v240 = vld [vmem:[%s183 + $0x28] sm:$0xff]
      %v241 = vld [vmem:[%s183 + $0x30] sm:$0xff]
      %v242 = vld [vmem:[%s183 + $0x38] sm:$0xff]
      %v243 = vld [vmem:[%s183 + $0x40] sm:$0xff]
      %v244 = vld [vmem:[%s183 + $0x48] sm:$0xff]
      %v245 = vld [vmem:[%s183 + $0x50] sm:$0xff]
      %v246 = vld [vmem:[%s183 + $0x58] sm:$0xff]
      %v247 = vld [vmem:[%s183 + $0x60] sm:$0xff]
      %v248 = vld [vmem:[%s183 + $0x68] sm:$0xff]
      %v249 = vld [vmem:[%s183 + $0x70] sm:$0xff]
      %v250 = vld [vmem:[%s183 + $0x78] sm:$0xff]
      %v251 = vld [vmem:[%s183 + $0x80] sm:$0xff]
      %v252 = vld [vmem:[%s183 + $0x88] sm:$0xff]
      %v253 = vld [vmem:[%s183 + $0x90] sm:$0xff]
      %v254 = vld [vmem:[%s183 + $0x98] sm:$0xff]
      %v255 = vld [vmem:[%s183 + $0xa0] sm:$0xff]
      %v256 = vld [vmem:[%s183 + $0xa8] sm:$0xff]
      %v257 = vld [vmem:[%s183 + $0xb0] sm:$0xff]
      %v258 = vld [vmem:[%s183 + $0xb8] sm:$0xff]
      %v259 = vld [vmem:[%s183 + $0xc0] sm:$0xff]
      %v260 = vld [vmem:[%s183 + $0xc8] sm:$0xff]
      %v261 = vld [vmem:[%s183 + $0xd0] sm:$0xff]
      %v262 = vld [vmem:[%s183 + $0xd8] sm:$0xff]
      %v263 = vld [vmem:[%s183 + $0xe0] sm:$0xff]
      %v264 = vld [vmem:[%s183 + $0xe8] sm:$0xff]
      %v265 = vld [vmem:[%s183 + $0xf0] sm:$0xff]
      %v266 = vld [vmem:[%s183 + $0xf8] sm:$0xff]
      %267 = vst.msk [vmem:[%s201 + $0x1] sm:$0xff] %vm192, %v235
      %268 = vst.msk [vmem:[%s201 + $0x9] sm:$0xff] %vm192, %v236
      %269 = vst.msk [vmem:[%s201 + $0x19] sm:$0xff] %vm192, %v237
      %270 = vst.msk [vmem:[%s201 + $0x21] sm:$0xff] %vm192, %v238
      %271 = vst.msk [vmem:[%s201 + $0x31] sm:$0xff] %vm192, %v239
      %272 = vst.msk [vmem:[%s201 + $0x39] sm:$0xff] %vm192, %v240
      %273 = vst.msk [vmem:[%s201 + $0x49] sm:$0xff] %vm192, %v241
      %274 = vst.msk [vmem:[%s201 + $0x51] sm:$0xff] %vm192, %v242
      %275 = vst.msk [vmem:[%s201 + $0x61] sm:$0xff] %vm192, %v243
      %276 = vst.msk [vmem:[%s201 + $0x69] sm:$0xff] %vm192, %v244
      %277 = vst.msk [vmem:[%s201 + $0x79] sm:$0xff] %vm192, %v245
      %278 = vst.msk [vmem:[%s201 + $0x81] sm:$0xff] %vm192, %v246
      %279 = vst.msk [vmem:[%s201 + $0x91] sm:$0xff] %vm192, %v247
      %280 = vst.msk [vmem:[%s201 + $0x99] sm:$0xff] %vm192, %v248
      %281 = vst.msk [vmem:[%s201 + $0xa9] sm:$0xff] %vm192, %v249
      %282 = vst.msk [vmem:[%s201 + $0xb1] sm:$0xff] %vm192, %v250
      %283 = vst.msk [vmem:[%s201 + $0xc1] sm:$0xff] %vm192, %v251
      %284 = vst.msk [vmem:[%s201 + $0xc9] sm:$0xff] %vm192, %v252
      %285 = vst.msk [vmem:[%s201 + $0xd9] sm:$0xff] %vm192, %v253
      %286 = vst.msk [vmem:[%s201 + $0xe1] sm:$0xff] %vm192, %v254
      %287 = vst.msk [vmem:[%s201 + $0xf1] sm:$0xff] %vm192, %v255
      %288 = vst.msk [vmem:[%s201 + $0xf9] sm:$0xff] %vm192, %v256
      %289 = vst.msk [vmem:[%s201 + $0x109] sm:$0xff] %vm192, %v257
      %290 = vst.msk [vmem:[%s201 + $0x111] sm:$0xff] %vm192, %v258
      %291 = vst.msk [vmem:[%s201 + $0x121] sm:$0xff] %vm192, %v259
      %292 = vst.msk [vmem:[%s201 + $0x129] sm:$0xff] %vm192, %v260
      %293 = vst.msk [vmem:[%s201 + $0x139] sm:$0xff] %vm192, %v261
      %294 = vst.msk [vmem:[%s201 + $0x141] sm:$0xff] %vm192, %v262
      %295 = vst.msk [vmem:[%s201 + $0x151] sm:$0xff] %vm192, %v263
      %296 = vst.msk [vmem:[%s201 + $0x159] sm:$0xff] %vm192, %v264
      %297 = vst.msk [vmem:[%s201 + $0x169] sm:$0xff] %vm192, %v265
      %298 = vst.msk [vmem:[%s201 + $0x171] sm:$0xff] %vm192, %v266
      %v299 = vld [vmem:[%s175] sm:$0x1]
      %v300 = vld [vmem:[%s175 + $0x1] sm:$0x1]
      %v301 = vld [vmem:[%s175 + $0x2] sm:$0x1]
      %s302 = scalar_lea.vmem %s175, 4
      %v303 = vld [vmem:[%s302] sm:$0x1]
      %v304 = vld [vmem:[%s302 + $0x1] sm:$0x1]
      %v305 = vld [vmem:[%s302 + $0x2] sm:$0x1]
      %s306 = scalar_lea.vmem %s175, 8
      %v307 = vld [vmem:[%s306] sm:$0x1]
      %v308 = vld [vmem:[%s306 + $0x1] sm:$0x1]
      %v309 = vld [vmem:[%s306 + $0x2] sm:$0x1]
      %s310 = smul.u32 0, 24
      %s311 = scalar_lea.vmem [#allocation2], %s310
      %v312 = vld [vmem:[%s311] sm:$0xff]
      %v313 = vld [vmem:[%s311 + $0x8] sm:$0xff]
      %v314 = vld [vmem:[%s311 + $0x18] sm:$0xff]
      %v315 = vld [vmem:[%s311 + $0x20] sm:$0xff]
      %v316 = vld [vmem:[%s311 + $0x30] sm:$0xff]
      %v317 = vld [vmem:[%s311 + $0x38] sm:$0xff]
      %v318 = vld [vmem:[%s311 + $0x48] sm:$0xff]
      %v319 = vld [vmem:[%s311 + $0x50] sm:$0xff]
      %v320 = vld [vmem:[%s311 + $0x60] sm:$0xff]
      %v321 = vld [vmem:[%s311 + $0x68] sm:$0xff]
      %v322 = vld [vmem:[%s311 + $0x78] sm:$0xff]
      %v323 = vld [vmem:[%s311 + $0x80] sm:$0xff]
      %v324 = vld [vmem:[%s311 + $0x90] sm:$0xff]
      %v325 = vld [vmem:[%s311 + $0x98] sm:$0xff]
      %v326 = vld [vmem:[%s311 + $0xa8] sm:$0xff]
      %v327 = vld [vmem:[%s311 + $0xb0] sm:$0xff]
      %v328 = vld [vmem:[%s311 + $0xc0] sm:$0xff]
      %v329 = vld [vmem:[%s311 + $0xc8] sm:$0xff]
      %v330 = vld [vmem:[%s311 + $0xd8] sm:$0xff]
      %v331 = vld [vmem:[%s311 + $0xe0] sm:$0xff]
      %v332 = vld [vmem:[%s311 + $0xf0] sm:$0xff]
      %v333 = vld [vmem:[%s311 + $0xf8] sm:$0xff]
      %v334 = vld [vmem:[%s311 + $0x108] sm:$0xff]
      %v335 = vld [vmem:[%s311 + $0x110] sm:$0xff]
      %v336 = vld [vmem:[%s311 + $0x120] sm:$0xff]
      %v337 = vld [vmem:[%s311 + $0x128] sm:$0xff]
      %v338 = vld [vmem:[%s311 + $0x138] sm:$0xff]
      %v339 = vld [vmem:[%s311 + $0x140] sm:$0xff]
      %v340 = vld [vmem:[%s311 + $0x150] sm:$0xff]
      %v341 = vld [vmem:[%s311 + $0x158] sm:$0xff]
      %v342 = vld [vmem:[%s311 + $0x168] sm:$0xff]
      %v343 = vld [vmem:[%s311 + $0x170] sm:$0xff]
      %v344 = vlaneseq
      %v345 = vshrl.u32 %v344, 7
      %v346 = vsub.s32 0, %v345
      %v347 = vrot.slane %v299, %v346
      %v348 = vmul.f32 %v347, %v312
      %v349 = vmul.f32 %v347, %v313
      %v350 = vmul.f32 %v347, %v314
      %v351 = vmul.f32 %v347, %v315
      %v352 = vmul.f32 %v347, %v316
      %v353 = vmul.f32 %v347, %v317
      %v354 = vmul.f32 %v347, %v318
      %v355 = vmul.f32 %v347, %v319
      %v356 = vmul.f32 %v347, %v320
      %v357 = vmul.f32 %v347, %v321
      %v358 = vmul.f32 %v347, %v322
      %v359 = vmul.f32 %v347, %v323
      %v360 = vmul.f32 %v347, %v324
      %v361 = vmul.f32 %v347, %v325
      %v362 = vmul.f32 %v347, %v326
      %v363 = vmul.f32 %v347, %v327
      %v364 = vmul.f32 %v347, %v328
      %v365 = vmul.f32 %v347, %v329
      %v366 = vmul.f32 %v347, %v330
      %v367 = vmul.f32 %v347, %v331
      %v368 = vmul.f32 %v347, %v332
      %v369 = vmul.f32 %v347, %v333
      %v370 = vmul.f32 %v347, %v334
      %v371 = vmul.f32 %v347, %v335
      %v372 = vmul.f32 %v347, %v336
      %v373 = vmul.f32 %v347, %v337
      %v374 = vmul.f32 %v347, %v338
      %v375 = vmul.f32 %v347, %v339
      %v376 = vmul.f32 %v347, %v340
      %v377 = vmul.f32 %v347, %v341
      %v378 = vmul.f32 %v347, %v342
      %v379 = vmul.f32 %v347, %v343
      %v380 = vld [vmem:[%s311 + $0x1] sm:$0xff]
      %v381 = vld [vmem:[%s311 + $0x9] sm:$0xff]
      %v382 = vld [vmem:[%s311 + $0x19] sm:$0xff]
      %v383 = vld [vmem:[%s311 + $0x21] sm:$0xff]
      %v384 = vld [vmem:[%s311 + $0x31] sm:$0xff]
      %v385 = vld [vmem:[%s311 + $0x39] sm:$0xff]
      %v386 = vld [vmem:[%s311 + $0x49] sm:$0xff]
      %v387 = vld [vmem:[%s311 + $0x51] sm:$0xff]
      %v388 = vld [vmem:[%s311 + $0x61] sm:$0xff]
      %v389 = vld [vmem:[%s311 + $0x69] sm:$0xff]
      %v390 = vld [vmem:[%s311 + $0x79] sm:$0xff]
      %v391 = vld [vmem:[%s311 + $0x81] sm:$0xff]
      %v392 = vld [vmem:[%s311 + $0x91] sm:$0xff]
      %v393 = vld [vmem:[%s311 + $0x99] sm:$0xff]
      %v394 = vld [vmem:[%s311 + $0xa9] sm:$0xff]
      %v395 = vld [vmem:[%s311 + $0xb1] sm:$0xff]
      %v396 = vld [vmem:[%s311 + $0xc1] sm:$0xff]
      %v397 = vld [vmem:[%s311 + $0xc9] sm:$0xff]
      %v398 = vld [vmem:[%s311 + $0xd9] sm:$0xff]
      %v399 = vld [vmem:[%s311 + $0xe1] sm:$0xff]
      %v400 = vld [vmem:[%s311 + $0xf1] sm:$0xff]
      %v401 = vld [vmem:[%s311 + $0xf9] sm:$0xff]
      %v402 = vld [vmem:[%s311 + $0x109] sm:$0xff]
      %v403 = vld [vmem:[%s311 + $0x111] sm:$0xff]
      %v404 = vld [vmem:[%s311 + $0x121] sm:$0xff]
      %v405 = vld [vmem:[%s311 + $0x129] sm:$0xff]
      %v406 = vld [vmem:[%s311 + $0x139] sm:$0xff]
      %v407 = vld [vmem:[%s311 + $0x141] sm:$0xff]
      %v408 = vld [vmem:[%s311 + $0x151] sm:$0xff]
      %v409 = vld [vmem:[%s311 + $0x159] sm:$0xff]
      %v410 = vld [vmem:[%s311 + $0x169] sm:$0xff]
      %v411 = vld [vmem:[%s311 + $0x171] sm:$0xff]
      %v412 = vlaneseq
      %v413 = vshrl.u32 %v412, 7
      %v414 = vsub.s32 0, %v413
      %v415 = vrot.slane %v300, %v414
      %v416 = vmul.f32 %v415, %v380
      %v417 = vmul.f32 %v415, %v381
      %v418 = vmul.f32 %v415, %v382
      %v419 = vmul.f32 %v415, %v383
      %v420 = vmul.f32 %v415, %v384
      %v421 = vmul.f32 %v415, %v385
      %v422 = vmul.f32 %v415, %v386
      %v423 = vmul.f32 %v415, %v387
      %v424 = vmul.f32 %v415, %v388
      %v425 = vmul.f32 %v415, %v389
      %v426 = vmul.f32 %v415, %v390
      %v427 = vmul.f32 %v415, %v391
      %v428 = vmul.f32 %v415, %v392
      %v429 = vmul.f32 %v415, %v393
      %v430 = vmul.f32 %v415, %v394
      %v431 = vmul.f32 %v415, %v395
      %v432 = vmul.f32 %v415, %v396
      %v433 = vmul.f32 %v415, %v397
      %v434 = vmul.f32 %v415, %v398
      %v435 = vmul.f32 %v415, %v399
      %v436 = vmul.f32 %v415, %v400
      %v437 = vmul.f32 %v415, %v401
      %v438 = vmul.f32 %v415, %v402
      %v439 = vmul.f32 %v415, %v403
      %v440 = vmul.f32 %v415, %v404
      %v441 = vmul.f32 %v415, %v405
      %v442 = vmul.f32 %v415, %v406
      %v443 = vmul.f32 %v415, %v407
      %v444 = vmul.f32 %v415, %v408
      %v445 = vmul.f32 %v415, %v409
      %v446 = vmul.f32 %v415, %v410
      %v447 = vmul.f32 %v415, %v411
      %v448 = vadd.f32 %v348, %v416
      %v449 = vadd.f32 %v349, %v417
      %v450 = vadd.f32 %v350, %v418
      %v451 = vadd.f32 %v351, %v419
      %v452 = vadd.f32 %v352, %v420
      %v453 = vadd.f32 %v353, %v421
      %v454 = vadd.f32 %v354, %v422
      %v455 = vadd.f32 %v355, %v423
      %v456 = vadd.f32 %v356, %v424
      %v457 = vadd.f32 %v357, %v425
      %v458 = vadd.f32 %v358, %v426
      %v459 = vadd.f32 %v359, %v427
      %v460 = vadd.f32 %v360, %v428
      %v461 = vadd.f32 %v361, %v429
      %v462 = vadd.f32 %v362, %v430
      %v463 = vadd.f32 %v363, %v431
      %v464 = vadd.f32 %v364, %v432
      %v465 = vadd.f32 %v365, %v433
      %v466 = vadd.f32 %v366, %v434
      %v467 = vadd.f32 %v367, %v435
      %v468 = vadd.f32 %v368, %v436
      %v469 = vadd.f32 %v369, %v437
      %v470 = vadd.f32 %v370, %v438
      %v471 = vadd.f32 %v371, %v439
      %v472 = vadd.f32 %v372, %v440
      %v473 = vadd.f32 %v373, %v441
      %v474 = vadd.f32 %v374, %v442
      %v475 = vadd.f32 %v375, %v443
      %v476 = vadd.f32 %v376, %v444
      %v477 = vadd.f32 %v377, %v445
      %v478 = vadd.f32 %v378, %v446
      %v479 = vadd.f32 %v379, %v447
      %v480 = vld [vmem:[%s311 + $0x2] sm:$0xff]
      %v481 = vld [vmem:[%s311 + $0xa] sm:$0xff]
      %v482 = vld [vmem:[%s311 + $0x1a] sm:$0xff]
      %v483 = vld [vmem:[%s311 + $0x22] sm:$0xff]
      %v484 = vld [vmem:[%s311 + $0x32] sm:$0xff]
      %v485 = vld [vmem:[%s311 + $0x3a] sm:$0xff]
      %v486 = vld [vmem:[%s311 + $0x4a] sm:$0xff]
      %v487 = vld [vmem:[%s311 + $0x52] sm:$0xff]
      %v488 = vld [vmem:[%s311 + $0x62] sm:$0xff]
      %v489 = vld [vmem:[%s311 + $0x6a] sm:$0xff]
      %v490 = vld [vmem:[%s311 + $0x7a] sm:$0xff]
      %v491 = vld [vmem:[%s311 + $0x82] sm:$0xff]
      %v492 = vld [vmem:[%s311 + $0x92] sm:$0xff]
      %v493 = vld [vmem:[%s311 + $0x9a] sm:$0xff]
      %v494 = vld [vmem:[%s311 + $0xaa] sm:$0xff]
      %v495 = vld [vmem:[%s311 + $0xb2] sm:$0xff]
      %v496 = vld [vmem:[%s311 + $0xc2] sm:$0xff]
      %v497 = vld [vmem:[%s311 + $0xca] sm:$0xff]
      %v498 = vld [vmem:[%s311 + $0xda] sm:$0xff]
      %v499 = vld [vmem:[%s311 + $0xe2] sm:$0xff]
      %v500 = vld [vmem:[%s311 + $0xf2] sm:$0xff]
      %v501 = vld [vmem:[%s311 + $0xfa] sm:$0xff]
      %v502 = vld [vmem:[%s311 + $0x10a] sm:$0xff]
      %v503 = vld [vmem:[%s311 + $0x112] sm:$0xff]
      %v504 = vld [vmem:[%s311 + $0x122] sm:$0xff]
      %v505 = vld [vmem:[%s311 + $0x12a] sm:$0xff]
      %v506 = vld [vmem:[%s311 + $0x13a] sm:$0xff]
      %v507 = vld [vmem:[%s311 + $0x142] sm:$0xff]
      %v508 = vld [vmem:[%s311 + $0x152] sm:$0xff]
      %v509 = vld [vmem:[%s311 + $0x15a] sm:$0xff]
      %v510 = vld [vmem:[%s311 + $0x16a] sm:$0xff]
      %v511 = vld [vmem:[%s311 + $0x172] sm:$0xff]
      %v512 = vlaneseq
      %v513 = vshrl.u32 %v512, 7
      %v514 = vsub.s32 0, %v513
      %v515 = vrot.slane %v301, %v514
      %v516 = vmul.f32 %v515, %v480
      %v517 = vmul.f32 %v515, %v481
      %v518 = vmul.f32 %v515, %v482
      %v519 = vmul.f32 %v515, %v483
      %v520 = vmul.f32 %v515, %v484
      %v521 = vmul.f32 %v515, %v485
      %v522 = vmul.f32 %v515, %v486
      %v523 = vmul.f32 %v515, %v487
      %v524 = vmul.f32 %v515, %v488
      %v525 = vmul.f32 %v515, %v489
      %v526 = vmul.f32 %v515, %v490
      %v527 = vmul.f32 %v515, %v491
      %v528 = vmul.f32 %v515, %v492
      %v529 = vmul.f32 %v515, %v493
      %v530 = vmul.f32 %v515, %v494
      %v531 = vmul.f32 %v515, %v495
      %v532 = vmul.f32 %v515, %v496
      %v533 = vmul.f32 %v515, %v497
      %v534 = vmul.f32 %v515, %v498
      %v535 = vmul.f32 %v515, %v499
      %v536 = vmul.f32 %v515, %v500
      %v537 = vmul.f32 %v515, %v501
      %v538 = vmul.f32 %v515, %v502
      %v539 = vmul.f32 %v515, %v503
      %v540 = vmul.f32 %v515, %v504
      %v541 = vmul.f32 %v515, %v505
      %v542 = vmul.f32 %v515, %v506
      %v543 = vmul.f32 %v515, %v507
      %v544 = vmul.f32 %v515, %v508
      %v545 = vmul.f32 %v515, %v509
      %v546 = vmul.f32 %v515, %v510
      %v547 = vmul.f32 %v515, %v511
      %v548 = vadd.f32 %v448, %v516
      %v549 = vadd.f32 %v449, %v517
      %v550 = vadd.f32 %v450, %v518
      %v551 = vadd.f32 %v451, %v519
      %v552 = vadd.f32 %v452, %v520
      %v553 = vadd.f32 %v453, %v521
      %v554 = vadd.f32 %v454, %v522
      %v555 = vadd.f32 %v455, %v523
      %v556 = vadd.f32 %v456, %v524
      %v557 = vadd.f32 %v457, %v525
      %v558 = vadd.f32 %v458, %v526
      %v559 = vadd.f32 %v459, %v527
      %v560 = vadd.f32 %v460, %v528
      %v561 = vadd.f32 %v461, %v529
      %v562 = vadd.f32 %v462, %v530
      %v563 = vadd.f32 %v463, %v531
      %v564 = vadd.f32 %v464, %v532
      %v565 = vadd.f32 %v465, %v533
      %v566 = vadd.f32 %v466, %v534
      %v567 = vadd.f32 %v467, %v535
      %v568 = vadd.f32 %v468, %v536
      %v569 = vadd.f32 %v469, %v537
      %v570 = vadd.f32 %v470, %v538
      %v571 = vadd.f32 %v471, %v539
      %v572 = vadd.f32 %v472, %v540
      %v573 = vadd.f32 %v473, %v541
      %v574 = vadd.f32 %v474, %v542
      %v575 = vadd.f32 %v475, %v543
      %v576 = vadd.f32 %v476, %v544
      %v577 = vadd.f32 %v477, %v545
      %v578 = vadd.f32 %v478, %v546
      %v579 = vadd.f32 %v479, %v547
      %s580 = sadd.s32 0, 1
      %s581 = smul.u32 %s580, 24
      %s582 = scalar_lea.vmem [#allocation2], %s581
      %v583 = vld [vmem:[%s582] sm:$0xff]
      %v584 = vld [vmem:[%s582 + $0x8] sm:$0xff]
      %v585 = vld [vmem:[%s582 + $0x18] sm:$0xff]
      %v586 = vld [vmem:[%s582 + $0x20] sm:$0xff]
      %v587 = vld [vmem:[%s582 + $0x30] sm:$0xff]
      %v588 = vld [vmem:[%s582 + $0x38] sm:$0xff]
      %v589 = vld [vmem:[%s582 + $0x48] sm:$0xff]
      %v590 = vld [vmem:[%s582 + $0x50] sm:$0xff]
      %v591 = vld [vmem:[%s582 + $0x60] sm:$0xff]
      %v592 = vld [vmem:[%s582 + $0x68] sm:$0xff]
      %v593 = vld [vmem:[%s582 + $0x78] sm:$0xff]
      %v594 = vld [vmem:[%s582 + $0x80] sm:$0xff]
      %v595 = vld [vmem:[%s582 + $0x90] sm:$0xff]
      %v596 = vld [vmem:[%s582 + $0x98] sm:$0xff]
      %v597 = vld [vmem:[%s582 + $0xa8] sm:$0xff]
      %v598 = vld [vmem:[%s582 + $0xb0] sm:$0xff]
      %v599 = vld [vmem:[%s582 + $0xc0] sm:$0xff]
      %v600 = vld [vmem:[%s582 + $0xc8] sm:$0xff]
      %v601 = vld [vmem:[%s582 + $0xd8] sm:$0xff]
      %v602 = vld [vmem:[%s582 + $0xe0] sm:$0xff]
      %v603 = vld [vmem:[%s582 + $0xf0] sm:$0xff]
      %v604 = vld [vmem:[%s582 + $0xf8] sm:$0xff]
      %v605 = vld [vmem:[%s582 + $0x108] sm:$0xff]
      %v606 = vld [vmem:[%s582 + $0x110] sm:$0xff]
      %v607 = vld [vmem:[%s582 + $0x120] sm:$0xff]
      %v608 = vld [vmem:[%s582 + $0x128] sm:$0xff]
      %v609 = vld [vmem:[%s582 + $0x138] sm:$0xff]
      %v610 = vld [vmem:[%s582 + $0x140] sm:$0xff]
      %v611 = vld [vmem:[%s582 + $0x150] sm:$0xff]
      %v612 = vld [vmem:[%s582 + $0x158] sm:$0xff]
      %v613 = vld [vmem:[%s582 + $0x168] sm:$0xff]
      %v614 = vld [vmem:[%s582 + $0x170] sm:$0xff]
      %v615 = vlaneseq
      %v616 = vshrl.u32 %v615, 7
      %v617 = vsub.s32 0, %v616
      %v618 = vrot.slane %v303, %v617
      %v619 = vmul.f32 %v618, %v583
      %v620 = vmul.f32 %v618, %v584
      %v621 = vmul.f32 %v618, %v585
      %v622 = vmul.f32 %v618, %v586
      %v623 = vmul.f32 %v618, %v587
      %v624 = vmul.f32 %v618, %v588
      %v625 = vmul.f32 %v618, %v589
      %v626 = vmul.f32 %v618, %v590
      %v627 = vmul.f32 %v618, %v591
      %v628 = vmul.f32 %v618, %v592
      %v629 = vmul.f32 %v618, %v593
      %v630 = vmul.f32 %v618, %v594
      %v631 = vmul.f32 %v618, %v595
      %v632 = vmul.f32 %v618, %v596
      %v633 = vmul.f32 %v618, %v597
      %v634 = vmul.f32 %v618, %v598
      %v635 = vmul.f32 %v618, %v599
      %v636 = vmul.f32 %v618, %v600
      %v637 = vmul.f32 %v618, %v601
      %v638 = vmul.f32 %v618, %v602
      %v639 = vmul.f32 %v618, %v603
      %v640 = vmul.f32 %v618, %v604
      %v641 = vmul.f32 %v618, %v605
      %v642 = vmul.f32 %v618, %v606
      %v643 = vmul.f32 %v618, %v607
      %v644 = vmul.f32 %v618, %v608
      %v645 = vmul.f32 %v618, %v609
      %v646 = vmul.f32 %v618, %v610
      %v647 = vmul.f32 %v618, %v611
      %v648 = vmul.f32 %v618, %v612
      %v649 = vmul.f32 %v618, %v613
      %v650 = vmul.f32 %v618, %v614
      %v651 = vadd.f32 %v548, %v619
      %v652 = vadd.f32 %v549, %v620
      %v653 = vadd.f32 %v550, %v621
      %v654 = vadd.f32 %v551, %v622
      %v655 = vadd.f32 %v552, %v623
      %v656 = vadd.f32 %v553, %v624
      %v657 = vadd.f32 %v554, %v625
      %v658 = vadd.f32 %v555, %v626
      %v659 = vadd.f32 %v556, %v627
      %v660 = vadd.f32 %v557, %v628
      %v661 = vadd.f32 %v558, %v629
      %v662 = vadd.f32 %v559, %v630
      %v663 = vadd.f32 %v560, %v631
      %v664 = vadd.f32 %v561, %v632
      %v665 = vadd.f32 %v562, %v633
      %v666 = vadd.f32 %v563, %v634
      %v667 = vadd.f32 %v564, %v635
      %v668 = vadd.f32 %v565, %v636
      %v669 = vadd.f32 %v566, %v637
      %v670 = vadd.f32 %v567, %v638
      %v671 = vadd.f32 %v568, %v639
      %v672 = vadd.f32 %v569, %v640
      %v673 = vadd.f32 %v570, %v641
      %v674 = vadd.f32 %v571, %v642
      %v675 = vadd.f32 %v572, %v643
      %v676 = vadd.f32 %v573, %v644
      %v677 = vadd.f32 %v574, %v645
      %v678 = vadd.f32 %v575, %v646
      %v679 = vadd.f32 %v576, %v647
      %v680 = vadd.f32 %v577, %v648
      %v681 = vadd.f32 %v578, %v649
      %v682 = vadd.f32 %v579, %v650
      %v683 = vld [vmem:[%s582 + $0x1] sm:$0xff]
      %v684 = vld [vmem:[%s582 + $0x9] sm:$0xff]
      %v685 = vld [vmem:[%s582 + $0x19] sm:$0xff]
      %v686 = vld [vmem:[%s582 + $0x21] sm:$0xff]
      %v687 = vld [vmem:[%s582 + $0x31] sm:$0xff]
      %v688 = vld [vmem:[%s582 + $0x39] sm:$0xff]
      %v689 = vld [vmem:[%s582 + $0x49] sm:$0xff]
      %v690 = vld [vmem:[%s582 + $0x51] sm:$0xff]
      %v691 = vld [vmem:[%s582 + $0x61] sm:$0xff]
      %v692 = vld [vmem:[%s582 + $0x69] sm:$0xff]
      %v693 = vld [vmem:[%s582 + $0x79] sm:$0xff]
      %v694 = vld [vmem:[%s582 + $0x81] sm:$0xff]
      %v695 = vld [vmem:[%s582 + $0x91] sm:$0xff]
      %v696 = vld [vmem:[%s582 + $0x99] sm:$0xff]
      %v697 = vld [vmem:[%s582 + $0xa9] sm:$0xff]
      %v698 = vld [vmem:[%s582 + $0xb1] sm:$0xff]
      %v699 = vld [vmem:[%s582 + $0xc1] sm:$0xff]
      %v700 = vld [vmem:[%s582 + $0xc9] sm:$0xff]
      %v701 = vld [vmem:[%s582 + $0xd9] sm:$0xff]
      %v702 = vld [vmem:[%s582 + $0xe1] sm:$0xff]
      %v703 = vld [vmem:[%s582 + $0xf1] sm:$0xff]
      %v704 = vld [vmem:[%s582 + $0xf9] sm:$0xff]
      %v705 = vld [vmem:[%s582 + $0x109] sm:$0xff]
      %v706 = vld [vmem:[%s582 + $0x111] sm:$0xff]
      %v707 = vld [vmem:[%s582 + $0x121] sm:$0xff]
      %v708 = vld [vmem:[%s582 + $0x129] sm:$0xff]
      %v709 = vld [vmem:[%s582 + $0x139] sm:$0xff]
      %v710 = vld [vmem:[%s582 + $0x141] sm:$0xff]
      %v711 = vld [vmem:[%s582 + $0x151] sm:$0xff]
      %v712 = vld [vmem:[%s582 + $0x159] sm:$0xff]
      %v713 = vld [vmem:[%s582 + $0x169] sm:$0xff]
      %v714 = vld [vmem:[%s582 + $0x171] sm:$0xff]
      %v715 = vlaneseq
      %v716 = vshrl.u32 %v715, 7
      %v717 = vsub.s32 0, %v716
      %v718 = vrot.slane %v304, %v717
      %v719 = vmul.f32 %v718, %v683
      %v720 = vmul.f32 %v718, %v684
      %v721 = vmul.f32 %v718, %v685
      %v722 = vmul.f32 %v718, %v686
      %v723 = vmul.f32 %v718, %v687
      %v724 = vmul.f32 %v718, %v688
      %v725 = vmul.f32 %v718, %v689
      %v726 = vmul.f32 %v718, %v690
      %v727 = vmul.f32 %v718, %v691
      %v728 = vmul.f32 %v718, %v692
      %v729 = vmul.f32 %v718, %v693
      %v730 = vmul.f32 %v718, %v694
      %v731 = vmul.f32 %v718, %v695
      %v732 = vmul.f32 %v718, %v696
      %v733 = vmul.f32 %v718, %v697
      %v734 = vmul.f32 %v718, %v698
      %v735 = vmul.f32 %v718, %v699
      %v736 = vmul.f32 %v718, %v700
      %v737 = vmul.f32 %v718, %v701
      %v738 = vmul.f32 %v718, %v702
      %v739 = vmul.f32 %v718, %v703
      %v740 = vmul.f32 %v718, %v704
      %v741 = vmul.f32 %v718, %v705
      %v742 = vmul.f32 %v718, %v706
      %v743 = vmul.f32 %v718, %v707
      %v744 = vmul.f32 %v718, %v708
      %v745 = vmul.f32 %v718, %v709
      %v746 = vmul.f32 %v718, %v710
      %v747 = vmul.f32 %v718, %v711
      %v748 = vmul.f32 %v718, %v712
      %v749 = vmul.f32 %v718, %v713
      %v750 = vmul.f32 %v718, %v714
      %v751 = vadd.f32 %v651, %v719
      %v752 = vadd.f32 %v652, %v720
      %v753 = vadd.f32 %v653, %v721
      %v754 = vadd.f32 %v654, %v722
      %v755 = vadd.f32 %v655, %v723
      %v756 = vadd.f32 %v656, %v724
      %v757 = vadd.f32 %v657, %v725
      %v758 = vadd.f32 %v658, %v726
      %v759 = vadd.f32 %v659, %v727
      %v760 = vadd.f32 %v660, %v728
      %v761 = vadd.f32 %v661, %v729
      %v762 = vadd.f32 %v662, %v730
      %v763 = vadd.f32 %v663, %v731
      %v764 = vadd.f32 %v664, %v732
      %v765 = vadd.f32 %v665, %v733
      %v766 = vadd.f32 %v666, %v734
      %v767 = vadd.f32 %v667, %v735
      %v768 = vadd.f32 %v668, %v736
      %v769 = vadd.f32 %v669, %v737
      %v770 = vadd.f32 %v670, %v738
      %v771 = vadd.f32 %v671, %v739
      %v772 = vadd.f32 %v672, %v740
      %v773 = vadd.f32 %v673, %v741
      %v774 = vadd.f32 %v674, %v742
      %v775 = vadd.f32 %v675, %v743
      %v776 = vadd.f32 %v676, %v744
      %v777 = vadd.f32 %v677, %v745
      %v778 = vadd.f32 %v678, %v746
      %v779 = vadd.f32 %v679, %v747
      %v780 = vadd.f32 %v680, %v748
      %v781 = vadd.f32 %v681, %v749
      %v782 = vadd.f32 %v682, %v750
      %v783 = vld [vmem:[%s582 + $0x2] sm:$0xff]
      %v784 = vld [vmem:[%s582 + $0xa] sm:$0xff]
      %v785 = vld [vmem:[%s582 + $0x1a] sm:$0xff]
      %v786 = vld [vmem:[%s582 + $0x22] sm:$0xff]
      %v787 = vld [vmem:[%s582 + $0x32] sm:$0xff]
      %v788 = vld [vmem:[%s582 + $0x3a] sm:$0xff]
      %v789 = vld [vmem:[%s582 + $0x4a] sm:$0xff]
      %v790 = vld [vmem:[%s582 + $0x52] sm:$0xff]
      %v791 = vld [vmem:[%s582 + $0x62] sm:$0xff]
      %v792 = vld [vmem:[%s582 + $0x6a] sm:$0xff]
      %v793 = vld [vmem:[%s582 + $0x7a] sm:$0xff]
      %v794 = vld [vmem:[%s582 + $0x82] sm:$0xff]
      %v795 = vld [vmem:[%s582 + $0x92] sm:$0xff]
      %v796 = vld [vmem:[%s582 + $0x9a] sm:$0xff]
      %v797 = vld [vmem:[%s582 + $0xaa] sm:$0xff]
      %v798 = vld [vmem:[%s582 + $0xb2] sm:$0xff]
      %v799 = vld [vmem:[%s582 + $0xc2] sm:$0xff]
      %v800 = vld [vmem:[%s582 + $0xca] sm:$0xff]
      %v801 = vld [vmem:[%s582 + $0xda] sm:$0xff]
      %v802 = vld [vmem:[%s582 + $0xe2] sm:$0xff]
      %v803 = vld [vmem:[%s582 + $0xf2] sm:$0xff]
      %v804 = vld [vmem:[%s582 + $0xfa] sm:$0xff]
      %v805 = vld [vmem:[%s582 + $0x10a] sm:$0xff]
      %v806 = vld [vmem:[%s582 + $0x112] sm:$0xff]
      %v807 = vld [vmem:[%s582 + $0x122] sm:$0xff]
      %v808 = vld [vmem:[%s582 + $0x12a] sm:$0xff]
      %v809 = vld [vmem:[%s582 + $0x13a] sm:$0xff]
      %v810 = vld [vmem:[%s582 + $0x142] sm:$0xff]
      %v811 = vld [vmem:[%s582 + $0x152] sm:$0xff]
      %v812 = vld [vmem:[%s582 + $0x15a] sm:$0xff]
      %v813 = vld [vmem:[%s582 + $0x16a] sm:$0xff]
      %v814 = vld [vmem:[%s582 + $0x172] sm:$0xff]
      %v815 = vlaneseq
      %v816 = vshrl.u32 %v815, 7
      %v817 = vsub.s32 0, %v816
      %v818 = vrot.slane %v305, %v817
      %v819 = vmul.f32 %v818, %v783
      %v820 = vmul.f32 %v818, %v784
      %v821 = vmul.f32 %v818, %v785
      %v822 = vmul.f32 %v818, %v786
      %v823 = vmul.f32 %v818, %v787
      %v824 = vmul.f32 %v818, %v788
      %v825 = vmul.f32 %v818, %v789
      %v826 = vmul.f32 %v818, %v790
      %v827 = vmul.f32 %v818, %v791
      %v828 = vmul.f32 %v818, %v792
      %v829 = vmul.f32 %v818, %v793
      %v830 = vmul.f32 %v818, %v794
      %v831 = vmul.f32 %v818, %v795
      %v832 = vmul.f32 %v818, %v796
      %v833 = vmul.f32 %v818, %v797
      %v834 = vmul.f32 %v818, %v798
      %v835 = vmul.f32 %v818, %v799
      %v836 = vmul.f32 %v818, %v800
      %v837 = vmul.f32 %v818, %v801
      %v838 = vmul.f32 %v818, %v802
      %v839 = vmul.f32 %v818, %v803
      %v840 = vmul.f32 %v818, %v804
      %v841 = vmul.f32 %v818, %v805
      %v842 = vmul.f32 %v818, %v806
      %v843 = vmul.f32 %v818, %v807
      %v844 = vmul.f32 %v818, %v808
      %v845 = vmul.f32 %v818, %v809
      %v846 = vmul.f32 %v818, %v810
      %v847 = vmul.f32 %v818, %v811
      %v848 = vmul.f32 %v818, %v812
      %v849 = vmul.f32 %v818, %v813
      %v850 = vmul.f32 %v818, %v814
      %v851 = vadd.f32 %v751, %v819
      %v852 = vadd.f32 %v752, %v820
      %v853 = vadd.f32 %v753, %v821
      %v854 = vadd.f32 %v754, %v822
      %v855 = vadd.f32 %v755, %v823
      %v856 = vadd.f32 %v756, %v824
      %v857 = vadd.f32 %v757, %v825
      %v858 = vadd.f32 %v758, %v826
      %v859 = vadd.f32 %v759, %v827
      %v860 = vadd.f32 %v760, %v828
      %v861 = vadd.f32 %v761, %v829
      %v862 = vadd.f32 %v762, %v830
      %v863 = vadd.f32 %v763, %v831
      %v864 = vadd.f32 %v764, %v832
      %v865 = vadd.f32 %v765, %v833
      %v866 = vadd.f32 %v766, %v834
      %v867 = vadd.f32 %v767, %v835
      %v868 = vadd.f32 %v768, %v836
      %v869 = vadd.f32 %v769, %v837
      %v870 = vadd.f32 %v770, %v838
      %v871 = vadd.f32 %v771, %v839
      %v872 = vadd.f32 %v772, %v840
      %v873 = vadd.f32 %v773, %v841
      %v874 = vadd.f32 %v774, %v842
      %v875 = vadd.f32 %v775, %v843
      %v876 = vadd.f32 %v776, %v844
      %v877 = vadd.f32 %v777, %v845
      %v878 = vadd.f32 %v778, %v846
      %v879 = vadd.f32 %v779, %v847
      %v880 = vadd.f32 %v780, %v848
      %v881 = vadd.f32 %v781, %v849
      %v882 = vadd.f32 %v782, %v850
      %s883 = sadd.s32 0, 2
      %s884 = smul.u32 %s883, 24
      %s885 = scalar_lea.vmem [#allocation2], %s884
      %v886 = vld [vmem:[%s885] sm:$0xff]
      %v887 = vld [vmem:[%s885 + $0x8] sm:$0xff]
      %v888 = vld [vmem:[%s885 + $0x18] sm:$0xff]
      %v889 = vld [vmem:[%s885 + $0x20] sm:$0xff]
      %v890 = vld [vmem:[%s885 + $0x30] sm:$0xff]
      %v891 = vld [vmem:[%s885 + $0x38] sm:$0xff]
      %v892 = vld [vmem:[%s885 + $0x48] sm:$0xff]
      %v893 = vld [vmem:[%s885 + $0x50] sm:$0xff]
      %v894 = vld [vmem:[%s885 + $0x60] sm:$0xff]
      %v895 = vld [vmem:[%s885 + $0x68] sm:$0xff]
      %v896 = vld [vmem:[%s885 + $0x78] sm:$0xff]
      %v897 = vld [vmem:[%s885 + $0x80] sm:$0xff]
      %v898 = vld [vmem:[%s885 + $0x90] sm:$0xff]
      %v899 = vld [vmem:[%s885 + $0x98] sm:$0xff]
      %v900 = vld [vmem:[%s885 + $0xa8] sm:$0xff]
      %v901 = vld [vmem:[%s885 + $0xb0] sm:$0xff]
      %v902 = vld [vmem:[%s885 + $0xc0] sm:$0xff]
      %v903 = vld [vmem:[%s885 + $0xc8] sm:$0xff]
      %v904 = vld [vmem:[%s885 + $0xd8] sm:$0xff]
      %v905 = vld [vmem:[%s885 + $0xe0] sm:$0xff]
      %v906 = vld [vmem:[%s885 + $0xf0] sm:$0xff]
      %v907 = vld [vmem:[%s885 + $0xf8] sm:$0xff]
      %v908 = vld [vmem:[%s885 + $0x108] sm:$0xff]
      %v909 = vld [vmem:[%s885 + $0x110] sm:$0xff]
      %v910 = vld [vmem:[%s885 + $0x120] sm:$0xff]
      %v911 = vld [vmem:[%s885 + $0x128] sm:$0xff]
      %v912 = vld [vmem:[%s885 + $0x138] sm:$0xff]
      %v913 = vld [vmem:[%s885 + $0x140] sm:$0xff]
      %v914 = vld [vmem:[%s885 + $0x150] sm:$0xff]
      %v915 = vld [vmem:[%s885 + $0x158] sm:$0xff]
      %v916 = vld [vmem:[%s885 + $0x168] sm:$0xff]
      %v917 = vld [vmem:[%s885 + $0x170] sm:$0xff]
      %v918 = vlaneseq
      %v919 = vshrl.u32 %v918, 7
      %v920 = vsub.s32 0, %v919
      %v921 = vrot.slane %v307, %v920
      %v922 = vmul.f32 %v921, %v886
      %v923 = vmul.f32 %v921, %v887
      %v924 = vmul.f32 %v921, %v888
      %v925 = vmul.f32 %v921, %v889
      %v926 = vmul.f32 %v921, %v890
      %v927 = vmul.f32 %v921, %v891
      %v928 = vmul.f32 %v921, %v892
      %v929 = vmul.f32 %v921, %v893
      %v930 = vmul.f32 %v921, %v894
      %v931 = vmul.f32 %v921, %v895
      %v932 = vmul.f32 %v921, %v896
      %v933 = vmul.f32 %v921, %v897
      %v934 = vmul.f32 %v921, %v898
      %v935 = vmul.f32 %v921, %v899
      %v936 = vmul.f32 %v921, %v900
      %v937 = vmul.f32 %v921, %v901
      %v938 = vmul.f32 %v921, %v902
      %v939 = vmul.f32 %v921, %v903
      %v940 = vmul.f32 %v921, %v904
      %v941 = vmul.f32 %v921, %v905
      %v942 = vmul.f32 %v921, %v906
      %v943 = vmul.f32 %v921, %v907
      %v944 = vmul.f32 %v921, %v908
      %v945 = vmul.f32 %v921, %v909
      %v946 = vmul.f32 %v921, %v910
      %v947 = vmul.f32 %v921, %v911
      %v948 = vmul.f32 %v921, %v912
      %v949 = vmul.f32 %v921, %v913
      %v950 = vmul.f32 %v921, %v914
      %v951 = vmul.f32 %v921, %v915
      %v952 = vmul.f32 %v921, %v916
      %v953 = vmul.f32 %v921, %v917
      %v954 = vadd.f32 %v851, %v922
      %v955 = vadd.f32 %v852, %v923
      %v956 = vadd.f32 %v853, %v924
      %v957 = vadd.f32 %v854, %v925
      %v958 = vadd.f32 %v855, %v926
      %v959 = vadd.f32 %v856, %v927
      %v960 = vadd.f32 %v857, %v928
      %v961 = vadd.f32 %v858, %v929
      %v962 = vadd.f32 %v859, %v930
      %v963 = vadd.f32 %v860, %v931
      %v964 = vadd.f32 %v861, %v932
      %v965 = vadd.f32 %v862, %v933
      %v966 = vadd.f32 %v863, %v934
      %v967 = vadd.f32 %v864, %v935
      %v968 = vadd.f32 %v865, %v936
      %v969 = vadd.f32 %v866, %v937
      %v970 = vadd.f32 %v867, %v938
      %v971 = vadd.f32 %v868, %v939
      %v972 = vadd.f32 %v869, %v940
      %v973 = vadd.f32 %v870, %v941
      %v974 = vadd.f32 %v871, %v942
      %v975 = vadd.f32 %v872, %v943
      %v976 = vadd.f32 %v873, %v944
      %v977 = vadd.f32 %v874, %v945
      %v978 = vadd.f32 %v875, %v946
      %v979 = vadd.f32 %v876, %v947
      %v980 = vadd.f32 %v877, %v948
      %v981 = vadd.f32 %v878, %v949
      %v982 = vadd.f32 %v879, %v950
      %v983 = vadd.f32 %v880, %v951
      %v984 = vadd.f32 %v881, %v952
      %v985 = vadd.f32 %v882, %v953
      %v986 = vld [vmem:[%s885 + $0x1] sm:$0xff]
      %v987 = vld [vmem:[%s885 + $0x9] sm:$0xff]
      %v988 = vld [vmem:[%s885 + $0x19] sm:$0xff]
      %v989 = vld [vmem:[%s885 + $0x21] sm:$0xff]
      %v990 = vld [vmem:[%s885 + $0x31] sm:$0xff]
      %v991 = vld [vmem:[%s885 + $0x39] sm:$0xff]
      %v992 = vld [vmem:[%s885 + $0x49] sm:$0xff]
      %v993 = vld [vmem:[%s885 + $0x51] sm:$0xff]
      %v994 = vld [vmem:[%s885 + $0x61] sm:$0xff]
      %v995 = vld [vmem:[%s885 + $0x69] sm:$0xff]
      %v996 = vld [vmem:[%s885 + $0x79] sm:$0xff]
      %v997 = vld [vmem:[%s885 + $0x81] sm:$0xff]
      %v998 = vld [vmem:[%s885 + $0x91] sm:$0xff]
      %v999 = vld [vmem:[%s885 + $0x99] sm:$0xff]
      %v1000 = vld [vmem:[%s885 + $0xa9] sm:$0xff]
      %v1001 = vld [vmem:[%s885 + $0xb1] sm:$0xff]
      %v1002 = vld [vmem:[%s885 + $0xc1] sm:$0xff]
      %v1003 = vld [vmem:[%s885 + $0xc9] sm:$0xff]
      %v1004 = vld [vmem:[%s885 + $0xd9] sm:$0xff]
      %v1005 = vld [vmem:[%s885 + $0xe1] sm:$0xff]
      %v1006 = vld [vmem:[%s885 + $0xf1] sm:$0xff]
      %v1007 = vld [vmem:[%s885 + $0xf9] sm:$0xff]
      %v1008 = vld [vmem:[%s885 + $0x109] sm:$0xff]
      %v1009 = vld [vmem:[%s885 + $0x111] sm:$0xff]
      %v1010 = vld [vmem:[%s885 + $0x121] sm:$0xff]
      %v1011 = vld [vmem:[%s885 + $0x129] sm:$0xff]
      %v1012 = vld [vmem:[%s885 + $0x139] sm:$0xff]
      %v1013 = vld [vmem:[%s885 + $0x141] sm:$0xff]
      %v1014 = vld [vmem:[%s885 + $0x151] sm:$0xff]
      %v1015 = vld [vmem:[%s885 + $0x159] sm:$0xff]
      %v1016 = vld [vmem:[%s885 + $0x169] sm:$0xff]
      %v1017 = vld [vmem:[%s885 + $0x171] sm:$0xff]
      %v1018 = vlaneseq
      %v1019 = vshrl.u32 %v1018, 7
      %v1020 = vsub.s32 0, %v1019
      %v1021 = vrot.slane %v308, %v1020
      %v1022 = vmul.f32 %v1021, %v986
      %v1023 = vmul.f32 %v1021, %v987
      %v1024 = vmul.f32 %v1021, %v988
      %v1025 = vmul.f32 %v1021, %v989
      %v1026 = vmul.f32 %v1021, %v990
      %v1027 = vmul.f32 %v1021, %v991
      %v1028 = vmul.f32 %v1021, %v992
      %v1029 = vmul.f32 %v1021, %v993
      %v1030 = vmul.f32 %v1021, %v994
      %v1031 = vmul.f32 %v1021, %v995
      %v1032 = vmul.f32 %v1021, %v996
      %v1033 = vmul.f32 %v1021, %v997
      %v1034 = vmul.f32 %v1021, %v998
      %v1035 = vmul.f32 %v1021, %v999
      %v1036 = vmul.f32 %v1021, %v1000
      %v1037 = vmul.f32 %v1021, %v1001
      %v1038 = vmul.f32 %v1021, %v1002
      %v1039 = vmul.f32 %v1021, %v1003
      %v1040 = vmul.f32 %v1021, %v1004
      %v1041 = vmul.f32 %v1021, %v1005
      %v1042 = vmul.f32 %v1021, %v1006
      %v1043 = vmul.f32 %v1021, %v1007
      %v1044 = vmul.f32 %v1021, %v1008
      %v1045 = vmul.f32 %v1021, %v1009
      %v1046 = vmul.f32 %v1021, %v1010
      %v1047 = vmul.f32 %v1021, %v1011
      %v1048 = vmul.f32 %v1021, %v1012
      %v1049 = vmul.f32 %v1021, %v1013
      %v1050 = vmul.f32 %v1021, %v1014
      %v1051 = vmul.f32 %v1021, %v1015
      %v1052 = vmul.f32 %v1021, %v1016
      %v1053 = vmul.f32 %v1021, %v1017
      %v1054 = vadd.f32 %v954, %v1022
      %v1055 = vadd.f32 %v955, %v1023
      %v1056 = vadd.f32 %v956, %v1024
      %v1057 = vadd.f32 %v957, %v1025
      %v1058 = vadd.f32 %v958, %v1026
      %v1059 = vadd.f32 %v959, %v1027
      %v1060 = vadd.f32 %v960, %v1028
      %v1061 = vadd.f32 %v961, %v1029
      %v1062 = vadd.f32 %v962, %v1030
      %v1063 = vadd.f32 %v963, %v1031
      %v1064 = vadd.f32 %v964, %v1032
      %v1065 = vadd.f32 %v965, %v1033
      %v1066 = vadd.f32 %v966, %v1034
      %v1067 = vadd.f32 %v967, %v1035
      %v1068 = vadd.f32 %v968, %v1036
      %v1069 = vadd.f32 %v969, %v1037
      %v1070 = vadd.f32 %v970, %v1038
      %v1071 = vadd.f32 %v971, %v1039
      %v1072 = vadd.f32 %v972, %v1040
      %v1073 = vadd.f32 %v973, %v1041
      %v1074 = vadd.f32 %v974, %v1042
      %v1075 = vadd.f32 %v975, %v1043
      %v1076 = vadd.f32 %v976, %v1044
      %v1077 = vadd.f32 %v977, %v1045
      %v1078 = vadd.f32 %v978, %v1046
      %v1079 = vadd.f32 %v979, %v1047
      %v1080 = vadd.f32 %v980, %v1048
      %v1081 = vadd.f32 %v981, %v1049
      %v1082 = vadd.f32 %v982, %v1050
      %v1083 = vadd.f32 %v983, %v1051
      %v1084 = vadd.f32 %v984, %v1052
      %v1085 = vadd.f32 %v985, %v1053
      %v1086 = vld [vmem:[%s885 + $0x2] sm:$0xff]
      %v1087 = vld [vmem:[%s885 + $0xa] sm:$0xff]
      %v1088 = vld [vmem:[%s885 + $0x1a] sm:$0xff]
      %v1089 = vld [vmem:[%s885 + $0x22] sm:$0xff]
      %v1090 = vld [vmem:[%s885 + $0x32] sm:$0xff]
      %v1091 = vld [vmem:[%s885 + $0x3a] sm:$0xff]
      %v1092 = vld [vmem:[%s885 + $0x4a] sm:$0xff]
      %v1093 = vld [vmem:[%s885 + $0x52] sm:$0xff]
      %v1094 = vld [vmem:[%s885 + $0x62] sm:$0xff]
      %v1095 = vld [vmem:[%s885 + $0x6a] sm:$0xff]
      %v1096 = vld [vmem:[%s885 + $0x7a] sm:$0xff]
      %v1097 = vld [vmem:[%s885 + $0x82] sm:$0xff]
      %v1098 = vld [vmem:[%s885 + $0x92] sm:$0xff]
      %v1099 = vld [vmem:[%s885 + $0x9a] sm:$0xff]
      %v1100 = vld [vmem:[%s885 + $0xaa] sm:$0xff]
      %v1101 = vld [vmem:[%s885 + $0xb2] sm:$0xff]
      %v1102 = vld [vmem:[%s885 + $0xc2] sm:$0xff]
      %v1103 = vld [vmem:[%s885 + $0xca] sm:$0xff]
      %v1104 = vld [vmem:[%s885 + $0xda] sm:$0xff]
      %v1105 = vld [vmem:[%s885 + $0xe2] sm:$0xff]
      %v1106 = vld [vmem:[%s885 + $0xf2] sm:$0xff]
      %v1107 = vld [vmem:[%s885 + $0xfa] sm:$0xff]
      %v1108 = vld [vmem:[%s885 + $0x10a] sm:$0xff]
      %v1109 = vld [vmem:[%s885 + $0x112] sm:$0xff]
      %v1110 = vld [vmem:[%s885 + $0x122] sm:$0xff]
      %v1111 = vld [vmem:[%s885 + $0x12a] sm:$0xff]
      %v1112 = vld [vmem:[%s885 + $0x13a] sm:$0xff]
      %v1113 = vld [vmem:[%s885 + $0x142] sm:$0xff]
      %v1114 = vld [vmem:[%s885 + $0x152] sm:$0xff]
      %v1115 = vld [vmem:[%s885 + $0x15a] sm:$0xff]
      %v1116 = vld [vmem:[%s885 + $0x16a] sm:$0xff]
      %v1117 = vld [vmem:[%s885 + $0x172] sm:$0xff]
      %v1118 = vlaneseq
      %v1119 = vshrl.u32 %v1118, 7
      %v1120 = vsub.s32 0, %v1119
      %v1121 = vrot.slane %v309, %v1120
      %v1122 = vmul.f32 %v1121, %v1086
      %v1123 = vmul.f32 %v1121, %v1087
      %v1124 = vmul.f32 %v1121, %v1088
      %v1125 = vmul.f32 %v1121, %v1089
      %v1126 = vmul.f32 %v1121, %v1090
      %v1127 = vmul.f32 %v1121, %v1091
      %v1128 = vmul.f32 %v1121, %v1092
      %v1129 = vmul.f32 %v1121, %v1093
      %v1130 = vmul.f32 %v1121, %v1094
      %v1131 = vmul.f32 %v1121, %v1095
      %v1132 = vmul.f32 %v1121, %v1096
      %v1133 = vmul.f32 %v1121, %v1097
      %v1134 = vmul.f32 %v1121, %v1098
      %v1135 = vmul.f32 %v1121, %v1099
      %v1136 = vmul.f32 %v1121, %v1100
      %v1137 = vmul.f32 %v1121, %v1101
      %v1138 = vmul.f32 %v1121, %v1102
      %v1139 = vmul.f32 %v1121, %v1103
      %v1140 = vmul.f32 %v1121, %v1104
      %v1141 = vmul.f32 %v1121, %v1105
      %v1142 = vmul.f32 %v1121, %v1106
      %v1143 = vmul.f32 %v1121, %v1107
      %v1144 = vmul.f32 %v1121, %v1108
      %v1145 = vmul.f32 %v1121, %v1109
      %v1146 = vmul.f32 %v1121, %v1110
      %v1147 = vmul.f32 %v1121, %v1111
      %v1148 = vmul.f32 %v1121, %v1112
      %v1149 = vmul.f32 %v1121, %v1113
      %v1150 = vmul.f32 %v1121, %v1114
      %v1151 = vmul.f32 %v1121, %v1115
      %v1152 = vmul.f32 %v1121, %v1116
      %v1153 = vmul.f32 %v1121, %v1117
      %v1154 = vadd.f32 %v1054, %v1122
      %v1155 = vadd.f32 %v1055, %v1123
      %v1156 = vadd.f32 %v1056, %v1124
      %v1157 = vadd.f32 %v1057, %v1125
      %v1158 = vadd.f32 %v1058, %v1126
      %v1159 = vadd.f32 %v1059, %v1127
      %v1160 = vadd.f32 %v1060, %v1128
      %v1161 = vadd.f32 %v1061, %v1129
      %v1162 = vadd.f32 %v1062, %v1130
      %v1163 = vadd.f32 %v1063, %v1131
      %v1164 = vadd.f32 %v1064, %v1132
      %v1165 = vadd.f32 %v1065, %v1133
      %v1166 = vadd.f32 %v1066, %v1134
      %v1167 = vadd.f32 %v1067, %v1135
      %v1168 = vadd.f32 %v1068, %v1136
      %v1169 = vadd.f32 %v1069, %v1137
      %v1170 = vadd.f32 %v1070, %v1138
      %v1171 = vadd.f32 %v1071, %v1139
      %v1172 = vadd.f32 %v1072, %v1140
      %v1173 = vadd.f32 %v1073, %v1141
      %v1174 = vadd.f32 %v1074, %v1142
      %v1175 = vadd.f32 %v1075, %v1143
      %v1176 = vadd.f32 %v1076, %v1144
      %v1177 = vadd.f32 %v1077, %v1145
      %v1178 = vadd.f32 %v1078, %v1146
      %v1179 = vadd.f32 %v1079, %v1147
      %v1180 = vadd.f32 %v1080, %v1148
      %v1181 = vadd.f32 %v1081, %v1149
      %v1182 = vadd.f32 %v1082, %v1150
      %v1183 = vadd.f32 %v1083, %v1151
      %v1184 = vadd.f32 %v1084, %v1152
      %v1185 = vadd.f32 %v1085, %v1153
      %vm1186 = vcmp.ge.f32.partialorder %v1154, 0.0
      %vm1187 = vcmp.ge.f32.partialorder %v1155, 0.0
      %vm1188 = vcmp.ge.f32.partialorder %v1156, 0.0
      %vm1189 = vcmp.ge.f32.partialorder %v1157, 0.0
      %vm1190 = vcmp.ge.f32.partialorder %v1158, 0.0
      %vm1191 = vcmp.ge.f32.partialorder %v1159, 0.0
      %vm1192 = vcmp.ge.f32.partialorder %v1160, 0.0
      %vm1193 = vcmp.ge.f32.partialorder %v1161, 0.0
      %vm1194 = vcmp.ge.f32.partialorder %v1162, 0.0
      %vm1195 = vcmp.ge.f32.partialorder %v1163, 0.0
      %vm1196 = vcmp.ge.f32.partialorder %v1164, 0.0
      %vm1197 = vcmp.ge.f32.partialorder %v1165, 0.0
      %vm1198 = vcmp.ge.f32.partialorder %v1166, 0.0
      %vm1199 = vcmp.ge.f32.partialorder %v1167, 0.0
      %vm1200 = vcmp.ge.f32.partialorder %v1168, 0.0
      %vm1201 = vcmp.ge.f32.partialorder %v1169, 0.0
      %vm1202 = vcmp.ge.f32.partialorder %v1170, 0.0
      %vm1203 = vcmp.ge.f32.partialorder %v1171, 0.0
      %vm1204 = vcmp.ge.f32.partialorder %v1172, 0.0
      %vm1205 = vcmp.ge.f32.partialorder %v1173, 0.0
      %vm1206 = vcmp.ge.f32.partialorder %v1174, 0.0
      %vm1207 = vcmp.ge.f32.partialorder %v1175, 0.0
      %vm1208 = vcmp.ge.f32.partialorder %v1176, 0.0
      %vm1209 = vcmp.ge.f32.partialorder %v1177, 0.0
      %vm1210 = vcmp.ge.f32.partialorder %v1178, 0.0
      %vm1211 = vcmp.ge.f32.partialorder %v1179, 0.0
      %vm1212 = vcmp.ge.f32.partialorder %v1180, 0.0
      %vm1213 = vcmp.ge.f32.partialorder %v1181, 0.0
      %vm1214 = vcmp.ge.f32.partialorder %v1182, 0.0
      %vm1215 = vcmp.ge.f32.partialorder %v1183, 0.0
      %vm1216 = vcmp.ge.f32.partialorder %v1184, 0.0
      %vm1217 = vcmp.ge.f32.partialorder %v1185, 0.0
      %v1218 = vmul.f32 %v1154, 0.2
      %v1219 = vmul.f32 %v1155, 0.2
      %v1220 = vmul.f32 %v1156, 0.2
      %v1221 = vmul.f32 %v1157, 0.2
      %v1222 = vmul.f32 %v1158, 0.2
      %v1223 = vmul.f32 %v1159, 0.2
      %v1224 = vmul.f32 %v1160, 0.2
      %v1225 = vmul.f32 %v1161, 0.2
      %v1226 = vmul.f32 %v1162, 0.2
      %v1227 = vmul.f32 %v1163, 0.2
      %v1228 = vmul.f32 %v1164, 0.2
      %v1229 = vmul.f32 %v1165, 0.2
      %v1230 = vmul.f32 %v1166, 0.2
      %v1231 = vmul.f32 %v1167, 0.2
      %v1232 = vmul.f32 %v1168, 0.2
      %v1233 = vmul.f32 %v1169, 0.2
      %v1234 = vmul.f32 %v1170, 0.2
      %v1235 = vmul.f32 %v1171, 0.2
      %v1236 = vmul.f32 %v1172, 0.2
      %v1237 = vmul.f32 %v1173, 0.2
      %v1238 = vmul.f32 %v1174, 0.2
      %v1239 = vmul.f32 %v1175, 0.2
      %v1240 = vmul.f32 %v1176, 0.2
      %v1241 = vmul.f32 %v1177, 0.2
      %v1242 = vmul.f32 %v1178, 0.2
      %v1243 = vmul.f32 %v1179, 0.2
      %v1244 = vmul.f32 %v1180, 0.2
      %v1245 = vmul.f32 %v1181, 0.2
      %v1246 = vmul.f32 %v1182, 0.2
      %v1247 = vmul.f32 %v1183, 0.2
      %v1248 = vmul.f32 %v1184, 0.2
      %v1249 = vmul.f32 %v1185, 0.2
      %v1250 = vsel %vm1186, %v1154, %v1218
      %v1251 = vsel %vm1187, %v1155, %v1219
      %v1252 = vsel %vm1188, %v1156, %v1220
      %v1253 = vsel %vm1189, %v1157, %v1221
      %v1254 = vsel %vm1190, %v1158, %v1222
      %v1255 = vsel %vm1191, %v1159, %v1223
      %v1256 = vsel %vm1192, %v1160, %v1224
      %v1257 = vsel %vm1193, %v1161, %v1225
      %v1258 = vsel %vm1194, %v1162, %v1226
      %v1259 = vsel %vm1195, %v1163, %v1227
      %v1260 = vsel %vm1196, %v1164, %v1228
      %v1261 = vsel %vm1197, %v1165, %v1229
      %v1262 = vsel %vm1198, %v1166, %v1230
      %v1263 = vsel %vm1199, %v1167, %v1231
      %v1264 = vsel %vm1200, %v1168, %v1232
      %v1265 = vsel %vm1201, %v1169, %v1233
      %v1266 = vsel %vm1202, %v1170, %v1234
      %v1267 = vsel %vm1203, %v1171, %v1235
      %v1268 = vsel %vm1204, %v1172, %v1236
      %v1269 = vsel %vm1205, %v1173, %v1237
      %v1270 = vsel %vm1206, %v1174, %v1238
      %v1271 = vsel %vm1207, %v1175, %v1239
      %v1272 = vsel %vm1208, %v1176, %v1240
      %v1273 = vsel %vm1209, %v1177, %v1241
      %v1274 = vsel %vm1210, %v1178, %v1242
      %v1275 = vsel %vm1211, %v1179, %v1243
      %v1276 = vsel %vm1212, %v1180, %v1244
      %v1277 = vsel %vm1213, %v1181, %v1245
      %v1278 = vsel %vm1214, %v1182, %v1246
      %v1279 = vsel %vm1215, %v1183, %v1247
      %v1280 = vsel %vm1216, %v1184, %v1248
      %v1281 = vsel %vm1217, %v1185, %v1249
      %s1282 = smul.u32 0, 16
      %s1283 = scalar_lea.vmem %s191, %s1282
      %1284 = vst.msk [vmem:[%s1283] sm:$0xff] %vm192, %v1250
      %1285 = vst.msk [vmem:[%s1283 + $0x8] sm:$0xff] %vm192, %v1251
      %1286 = vst.msk [vmem:[%s1283 + $0x10] sm:$0xff] %vm192, %v1252
      %1287 = vst.msk [vmem:[%s1283 + $0x18] sm:$0xff] %vm192, %v1253
      %1288 = vst.msk [vmem:[%s1283 + $0x20] sm:$0xff] %vm192, %v1254
      %1289 = vst.msk [vmem:[%s1283 + $0x28] sm:$0xff] %vm192, %v1255
      %1290 = vst.msk [vmem:[%s1283 + $0x30] sm:$0xff] %vm192, %v1256
      %1291 = vst.msk [vmem:[%s1283 + $0x38] sm:$0xff] %vm192, %v1257
      %1292 = vst.msk [vmem:[%s1283 + $0x40] sm:$0xff] %vm192, %v1258
      %1293 = vst.msk [vmem:[%s1283 + $0x48] sm:$0xff] %vm192, %v1259
      %1294 = vst.msk [vmem:[%s1283 + $0x50] sm:$0xff] %vm192, %v1260
      %1295 = vst.msk [vmem:[%s1283 + $0x58] sm:$0xff] %vm192, %v1261
      %1296 = vst.msk [vmem:[%s1283 + $0x60] sm:$0xff] %vm192, %v1262
      %1297 = vst.msk [vmem:[%s1283 + $0x68] sm:$0xff] %vm192, %v1263
      %1298 = vst.msk [vmem:[%s1283 + $0x70] sm:$0xff] %vm192, %v1264
      %1299 = vst.msk [vmem:[%s1283 + $0x78] sm:$0xff] %vm192, %v1265
      %1300 = vst.msk [vmem:[%s1283 + $0x80] sm:$0xff] %vm192, %v1266
      %1301 = vst.msk [vmem:[%s1283 + $0x88] sm:$0xff] %vm192, %v1267
      %1302 = vst.msk [vmem:[%s1283 + $0x90] sm:$0xff] %vm192, %v1268
      %1303 = vst.msk [vmem:[%s1283 + $0x98] sm:$0xff] %vm192, %v1269
      %1304 = vst.msk [vmem:[%s1283 + $0xa0] sm:$0xff] %vm192, %v1270
      %1305 = vst.msk [vmem:[%s1283 + $0xa8] sm:$0xff] %vm192, %v1271
      %1306 = vst.msk [vmem:[%s1283 + $0xb0] sm:$0xff] %vm192, %v1272
      %1307 = vst.msk [vmem:[%s1283 + $0xb8] sm:$0xff] %vm192, %v1273
      %1308 = vst.msk [vmem:[%s1283 + $0xc0] sm:$0xff] %vm192, %v1274
      %1309 = vst.msk [vmem:[%s1283 + $0xc8] sm:$0xff] %vm192, %v1275
      %1310 = vst.msk [vmem:[%s1283 + $0xd0] sm:$0xff] %vm192, %v1276
      %1311 = vst.msk [vmem:[%s1283 + $0xd8] sm:$0xff] %vm192, %v1277
      %1312 = vst.msk [vmem:[%s1283 + $0xe0] sm:$0xff] %vm192, %v1278
      %1313 = vst.msk [vmem:[%s1283 + $0xe8] sm:$0xff] %vm192, %v1279
      %1314 = vst.msk [vmem:[%s1283 + $0xf0] sm:$0xff] %vm192, %v1280
      %1315 = vst.msk [vmem:[%s1283 + $0xf8] sm:$0xff] %vm192, %v1281
      %p1316 = scmp.lt.s32.totalorder %s17, 1
      %s1317 = scalar_select %p1316, %s17, 1
      %p1318 = scmp.lt.s32.totalorder %s18, 0
      %s1319 = scalar_select %p1318, %s18, 0
      %s1320 = smul.addr %s1317, 32
      %s1321 = sadd.s32 %s1319, %s1320
      %s1322 = smul.addr %s1321, 8
      %s1323 = scalar_lea.vmem %s2, %s1322
      // Predicated region
      $region29: #{tpu_custom_call.1} parent=27 // pred_check
        %p1324 = pneg %p99
      $region30: #{tpu_custom_call.1} parent=27 // pred_check_branch
        %1326 = sbr.rel (%p1324) target = $region32
      $region31: #{tpu_custom_call.1} parent=27 // pred_region
        _
      $region32: #{tpu_custom_call.1} parent=27 // pred_fallthru
        _
    $region28: #{tpu_custom_call.1} parent=5 // pred_fallthru
      _
    %p1327 = scmp.le.s32.totalorder 2, %s8
    // Predicated region
    $region33: #{tpu_custom_call.1} parent=5 // pred_check
      %p1328 = pneg %p1327
    $region34: #{tpu_custom_call.1} parent=5 // pred_check_branch
      %1330 = sbr.rel (%p1328) target = $region36
    $region35: #{tpu_custom_call.1} parent=5 // pred_region
      %s1331 = ssub.s32 %s8, 2
      // Predicated region
      $region37: #{tpu_custom_call.1} parent=35 // pred_check
        %p1332 = pneg %p105
      $region38: #{tpu_custom_call.1} parent=35 // pred_check_branch
        %1334 = sbr.rel (%p1332) target = $region40
      $region39: #{tpu_custom_call.1} parent=35 // pred_region
        %p1335 = scmp.lt.s32.totalorder %s19, 1
        %s1336 = scalar_select %p1335, %s19, 1
        %p1337 = scmp.lt.s32.totalorder %s20, 0
        %s1338 = scalar_select %p1337, %s20, 0
        %s1339 = smul.addr %s1336, 32
        %s1340 = sadd.s32 %s1338, %s1339
        %s1341 = smul.addr %s1340, 8
        %s1342 = scalar_lea.vmem %s2, %s1341
      $region40: #{tpu_custom_call.1} parent=35 // pred_fallthru
        _
    $region36: #{tpu_custom_call.1} parent=5 // pred_fallthru
      _
  $region6: #{tpu_custom_call.1} parent=0 // loop_footer
    %s12 = sadd.s32 1, %s8
  $region7: #{tpu_custom_call.1} parent=0 // loop_footer_branch
    %7 = sbr.rel target = $region3
  $region8: #{tpu_custom_call.1} parent=0 // loop_exit
    _

</llo_original>
